<compile_context>
chip_gen: v5e
topology: v5e:2x2
jax: 0.10.0
libtpu: 0.0.40
codegen_flags: <defaults>
</compile_context>

<pallas_src>
import jax
import jax.numpy as jnp
from jax.experimental import pallas as pl
from jax.experimental.pallas import tpu as pltpu

# ---------------- tiny-BERT config ----------------
BATCH = 2
SEQ = 8
HIDDEN = 32
N_HEADS = 2
HEAD_DIM = HIDDEN // N_HEADS
INTERMEDIATE = 64
N_LAYERS = 2
VOCAB = 128
MAX_POS = 16
TYPE_VOCAB = 2
N_CLASSES = 3
LN_EPS = 1e-12
LANE_PAD = 128            # lane-dense output slab width


# ---------------- fused forward kernel ----------------
def _bert_fused_kernel(
    x_ref, mbias_ref,
    emb_g_ref, emb_b_ref,
    wqkv_ref, bqkv_ref, wo_ref, bo_ref,
    ln1g_ref, ln1b_ref,
    w1_ref, b1_ref, w2_ref, b2_ref,
    ln2g_ref, ln2b_ref,
    pw_ref, pb_ref, cw_ref, cb_ref,
    o_ref,
):
    """Whole post-embedding BERT-classifier forward; everything stays in VMEM."""
    bf16 = jnp.bfloat16

    def layernorm(y, g, b):
        # residual add is folded in by the caller (y = x + delta); f32 math.
        mu = jnp.mean(y, axis=-1, keepdims=True)
        var = jnp.mean((y - mu) * (y - mu), axis=-1, keepdims=True)
        return (y - mu) * jax.lax.rsqrt(var + LN_EPS) * g + b

    # embedding sum arrives pre-computed (gather is plain-JAX glue); LN here.
    x = layernorm(x_ref[...], emb_g_ref[...], emb_b_ref[...])

    # additive attention-mask bias, already broadcast to the fused
    # (N_HEADS*BATCH, SEQ, SEQ) score shape by the wrapper.
    mbias = mbias_ref[...]

    scale = 1.0 / (HEAD_DIM ** 0.5)

    def split_heads(z):
        # (B*S, HIDDEN) -> (N_HEADS*B, S, HEAD_DIM): static lane-slices +
        # leading-dim reshapes + one leading-axis concat (no lane relayout of
        # data within a head).
        parts = [
            z[:, h * HEAD_DIM:(h + 1) * HEAD_DIM].reshape(BATCH, SEQ, HEAD_DIM)
            for h in range(N_HEADS)
        ]
        return jnp.concatenate(parts, axis=0)

    # static unroll — fine at N_LAYERS=2.
    # TODO(synk): at real depth use lax.fori_loop (or a layer grid axis with
    # streamed weight slabs) to bound the vreg live set / VMEM residency.
    for layer in range(N_LAYERS):
        # ---- fused QKV projection: single MXU push, bf16 operands, f32 acc ----
        qkv = jnp.dot(x.astype(bf16), wqkv_ref[layer],
                      preferred_element_type=jnp.float32) + bqkv_ref[layer]

        q = split_heads(qkv[:, 0 * HIDDEN:1 * HIDDEN])   # (H*B, S, D)
        k = split_heads(qkv[:, 1 * HIDDEN:2 * HIDDEN])
        v = split_heads(qkv[:, 2 * HIDDEN:3 * HIDDEN])

        # ---- attention: ONE batched score dot + ONE batched context dot ----
        s = jnp.einsum("bqd,bkd->bqk", q.astype(bf16), k.astype(bf16),
                       preferred_element_type=jnp.float32) * scale + mbias
        m = jnp.max(s, axis=-1, keepdims=True)
        p = jnp.exp(s - m)
        # divide -> EUP reciprocal (free co-issue slot)
        p = p * pl.reciprocal(jnp.sum(p, axis=-1, keepdims=True), approx=True)
        ctx_bh = jnp.einsum("bqk,bkd->bqd", p.astype(bf16), v.astype(bf16),
                            preferred_element_type=jnp.float32)  # (H*B, S, D)

        # merge heads back into lanes: one lane-concat + one leading-dim reshape
        ctx = jnp.concatenate(
            [ctx_bh[h * BATCH:(h + 1) * BATCH] for h in range(N_HEADS)], axis=-1
        ).reshape(BATCH * SEQ, HIDDEN)

        # ---- output projection; residual folded into LN ----
        attn_out = jnp.dot(ctx.astype(bf16), wo_ref[layer],
                           preferred_element_type=jnp.float32) + bo_ref[layer]
        x = layernorm(x + attn_out, ln1g_ref[layer], ln1b_ref[layer])

        # ---- FFN (GELU tanh-approx); residual folded into LN ----
        hdn = jnp.dot(x.astype(bf16), w1_ref[layer],
                      preferred_element_type=jnp.float32) + b1_ref[layer]
        hdn = 0.5 * hdn * (1.0 + jnp.tanh(
            0.7978845608028654 * (hdn + 0.044715 * hdn * hdn * hdn)))
        ff = jnp.dot(hdn.astype(bf16), w2_ref[layer],
                     preferred_element_type=jnp.float32) + b2_ref[layer]
        x = layernorm(x + ff, ln2g_ref[layer], ln2b_ref[layer])

    # ---- BERT pooler on the [CLS] token: strided view, no per-row concat ----
    cls = x.reshape(BATCH, SEQ, HIDDEN)[:, 0, :]          # (B, HIDDEN)
    pooled = jnp.tanh(jnp.dot(cls.astype(bf16), pw_ref[...],
                              preferred_element_type=jnp.float32) + pb_ref[...])

    # nn.Dropout(p=0.3): identity at inference.
    # TODO(synk): training-mode stochastic dropout masking not implemented.
    # Classifier weight is zero-padded to 128 lanes by the wrapper -> the
    # final matmul and the store below are lane-dense (no masked vst).
    logits = jnp.dot(pooled.astype(bf16), cw_ref[...],
                     preferred_element_type=jnp.float32) + cb_ref[...]
    o_ref[...] = logits.astype(o_ref.dtype)


def _full_spec(shape):
    # full-array block (grid=(1,)); block shape == array shape so the
    # (8,128) divisibility rule is trivially satisfied.
    if len(shape) == 2:
        return pl.BlockSpec(shape, lambda i: (0, 0))
    return pl.BlockSpec(shape, lambda i: (0, 0, 0))


def bert_classifier_forward(params, input_ids, attention_mask):
    B, S = input_ids.shape
    bf16 = jnp.bfloat16

    # Embedding gathers: plain-JAX glue (table lookup; no Pallas win at this size).
    # TODO(synk): token_type_ids are hard-coded to segment 0.
    pos = jnp.arange(S)
    x = (
        params["word_emb"][input_ids]
        + params["pos_emb"][pos][None, :, :]
        + params["type_emb"][0][None, None, :]
    ).reshape(B * S, HIDDEN).astype(jnp.float32)

    # Additive attention-mask bias, built once and pre-broadcast to the fused
    # (N_HEADS*B, S, S) score shape (head-major ordering matches split_heads).
    mb = (1.0 - attention_mask.astype(jnp.float32)) * -10000.0          # (B, S)
    mbias = jnp.tile(jnp.broadcast_to(mb[:, None, :], (B, S, S)),
                     (N_HEADS, 1, 1))                                    # (H*B, S, S)

    # lane-dense classifier: zero-pad weight/bias to 128 output lanes.
    cls_w_pad = jnp.zeros((HIDDEN, LANE_PAD), jnp.float32)
    cls_w_pad = cls_w_pad.at[:, :N_CLASSES].set(params["cls_w"])
    cls_b_pad = jnp.zeros((1, LANE_PAD), jnp.float32)
    cls_b_pad = cls_b_pad.at[:, :N_CLASSES].set(params["cls_b"])

    operands = (
        x, mbias,
        params["emb_ln_g"], params["emb_ln_b"],
        params["w_qkv"].astype(bf16), params["b_qkv"],
        params["w_o"].astype(bf16), params["b_o"],
        params["ln1_g"], params["ln1_b"],
        params["w_ffn1"].astype(bf16), params["b_ffn1"],
        params["w_ffn2"].astype(bf16), params["b_ffn2"],
        params["ln2_g"], params["ln2_b"],
        params["pool_w"].astype(bf16), params["pool_b"],
        cls_w_pad.astype(bf16), cls_b_pad,
    )

    logits_padded = pl.pallas_call(
        _bert_fused_kernel,
        grid=(1,),
        out_shape=jax.ShapeDtypeStruct((B, LANE_PAD), jnp.float32),
        in_specs=[_full_spec(op.shape) for op in operands],
        out_specs=_full_spec((B, LANE_PAD)),
        compiler_params=pltpu.CompilerParams(
            dimension_semantics=("arbitrary",),
            vmem_limit_bytes=32 * 1024 * 1024,
        ),
        cost_estimate=pl.CostEstimate(
            flops=600_000, transcendentals=8_000, bytes_accessed=200_000),
    )(*operands)

    return logits_padded[:, :N_CLASSES]


# ---------------- deterministic parameter init (QKV pre-fused, layers stacked) ----------------
def init_params(key):
    keys = iter(jax.random.split(key, 64))

    def normal(shape):
        return (0.02 * jax.random.normal(next(keys), shape)).astype(jnp.float32)

    def zeros(shape):
        return jnp.zeros(shape, jnp.float32)

    def ones(shape):
        return jnp.ones(shape, jnp.float32)

    return {
        "word_emb": normal((VOCAB, HIDDEN)),
        "pos_emb": normal((MAX_POS, HIDDEN)),
        "type_emb": normal((TYPE_VOCAB, HIDDEN)),
        "emb_ln_g": ones((1, HIDDEN)),
        "emb_ln_b": zeros((1, HIDDEN)),
        # per-layer weights stacked on a leading layer axis; Q/K/V concatenated.
        "w_qkv": normal((N_LAYERS, HIDDEN, 3 * HIDDEN)),
        "b_qkv": zeros((N_LAYERS, 1, 3 * HIDDEN)),
        "w_o": normal((N_LAYERS, HIDDEN, HIDDEN)),
        "b_o": zeros((N_LAYERS, 1, HIDDEN)),
        "ln1_g": ones((N_LAYERS, 1, HIDDEN)),
        "ln1_b": zeros((N_LAYERS, 1, HIDDEN)),
        "w_ffn1": normal((N_LAYERS, HIDDEN, INTERMEDIATE)),
        "b_ffn1": zeros((N_LAYERS, 1, INTERMEDIATE)),
        "w_ffn2": normal((N_LAYERS, INTERMEDIATE, HIDDEN)),
        "b_ffn2": zeros((N_LAYERS, 1, HIDDEN)),
        "ln2_g": ones((N_LAYERS, 1, HIDDEN)),
        "ln2_b": zeros((N_LAYERS, 1, HIDDEN)),
        "pool_w": normal((HIDDEN, HIDDEN)),
        "pool_b": zeros((1, HIDDEN)),
        "cls_w": normal((HIDDEN, N_CLASSES)),
        "cls_b": zeros((1, N_CLASSES)),
    }


if __name__ == "__main__":
    key = jax.random.PRNGKey(0)
    pkey, ikey = jax.random.split(key)
    params = init_params(pkey)

    input_ids = jax.random.randint(ikey, (BATCH, SEQ), 0, VOCAB, dtype=jnp.int32)
    attention_mask = jnp.array(
        [[1] * SEQ, [1] * (SEQ - 2) + [0, 0]], dtype=jnp.int32
    )

    logits = jax.jit(bert_classifier_forward)(params, input_ids, attention_mask)
    logits = jax.block_until_ready(logits)

    assert logits.shape == (BATCH, N_CLASSES)
    assert logits.dtype == jnp.float32
    assert bool(jnp.all(jnp.isfinite(logits)))
    print("KERNEL_OK")
</pallas_src>

<mosaic_0001>
module attributes {stable_mosaic.version = 11 : i64} {
  func.func @_bert_fused_kernel(%arg0: i32, %arg1: memref<16x32xf32, #tpu.memory_space<vmem>>, %arg2: memref<4x8x8xf32, #tpu.memory_space<vmem>>, %arg3: memref<1x32xf32, #tpu.memory_space<vmem>>, %arg4: memref<1x32xf32, #tpu.memory_space<vmem>>, %arg5: memref<2x32x96xbf16, #tpu.memory_space<vmem>>, %arg6: memref<2x1x96xf32, #tpu.memory_space<vmem>>, %arg7: memref<2x32x32xbf16, #tpu.memory_space<vmem>>, %arg8: memref<2x1x32xf32, #tpu.memory_space<vmem>>, %arg9: memref<2x1x32xf32, #tpu.memory_space<vmem>>, %arg10: memref<2x1x32xf32, #tpu.memory_space<vmem>>, %arg11: memref<2x32x64xbf16, #tpu.memory_space<vmem>>, %arg12: memref<2x1x64xf32, #tpu.memory_space<vmem>>, %arg13: memref<2x64x32xbf16, #tpu.memory_space<vmem>>, %arg14: memref<2x1x32xf32, #tpu.memory_space<vmem>>, %arg15: memref<2x1x32xf32, #tpu.memory_space<vmem>>, %arg16: memref<2x1x32xf32, #tpu.memory_space<vmem>>, %arg17: memref<32x32xbf16, #tpu.memory_space<vmem>>, %arg18: memref<1x32xf32, #tpu.memory_space<vmem>>, %arg19: memref<32x128xbf16, #tpu.memory_space<vmem>>, %arg20: memref<1x128xf32, #tpu.memory_space<vmem>>, %arg21: memref<2x128xf32, #tpu.memory_space<vmem>>) attributes {dimension_semantics = [#tpu.dimension_semantics<arbitrary>], iteration_bounds = array<i64: 1>, scalar_prefetch = 0 : i64, scratch_operands = 0 : i64, tpu.core_type = #tpu.core_type<tc>, window_params = [{pipeline_mode = #tpu.pipeline_mode<synchronous>, transform_indices = @transform_0, window_bounds = array<i64: 16, 32>}, {pipeline_mode = #tpu.pipeline_mode<synchronous>, transform_indices = @transform_1, window_bounds = array<i64: 4, 8, 8>}, {pipeline_mode = #tpu.pipeline_mode<synchronous>, transform_indices = @transform_2, window_bounds = array<i64: 1, 32>}, {pipeline_mode = #tpu.pipeline_mode<synchronous>, transform_indices = @transform_3, window_bounds = array<i64: 1, 32>}, {pipeline_mode = #tpu.pipeline_mode<synchronous>, transform_indices = @transform_4, window_bounds = array<i64: 2, 32, 96>}, {pipeline_mode = #tpu.pipeline_mode<synchronous>, transform_indices = @transform_5, window_bounds = array<i64: 2, 1, 96>}, {pipeline_mode = #tpu.pipeline_mode<synchronous>, transform_indices = @transform_6, window_bounds = array<i64: 2, 32, 32>}, {pipeline_mode = #tpu.pipeline_mode<synchronous>, transform_indices = @transform_7, window_bounds = array<i64: 2, 1, 32>}, {pipeline_mode = #tpu.pipeline_mode<synchronous>, transform_indices = @transform_8, window_bounds = array<i64: 2, 1, 32>}, {pipeline_mode = #tpu.pipeline_mode<synchronous>, transform_indices = @transform_9, window_bounds = array<i64: 2, 1, 32>}, {pipeline_mode = #tpu.pipeline_mode<synchronous>, transform_indices = @transform_10, window_bounds = array<i64: 2, 32, 64>}, {pipeline_mode = #tpu.pipeline_mode<synchronous>, transform_indices = @transform_11, window_bounds = array<i64: 2, 1, 64>}, {pipeline_mode = #tpu.pipeline_mode<synchronous>, transform_indices = @transform_12, window_bounds = array<i64: 2, 64, 32>}, {pipeline_mode = #tpu.pipeline_mode<synchronous>, transform_indices = @transform_13, window_bounds = array<i64: 2, 1, 32>}, {pipeline_mode = #tpu.pipeline_mode<synchronous>, transform_indices = @transform_14, window_bounds = array<i64: 2, 1, 32>}, {pipeline_mode = #tpu.pipeline_mode<synchronous>, transform_indices = @transform_15, window_bounds = array<i64: 2, 1, 32>}, {pipeline_mode = #tpu.pipeline_mode<synchronous>, transform_indices = @transform_16, window_bounds = array<i64: 32, 32>}, {pipeline_mode = #tpu.pipeline_mode<synchronous>, transform_indices = @transform_17, window_bounds = array<i64: 1, 32>}, {pipeline_mode = #tpu.pipeline_mode<synchronous>, transform_indices = @transform_18, window_bounds = array<i64: 32, 128>}, {pipeline_mode = #tpu.pipeline_mode<synchronous>, transform_indices = @transform_19, window_bounds = array<i64: 1, 128>}, {pipeline_mode = #tpu.pipeline_mode<synchronous>, transform_indices = @transform_20, window_bounds = array<i64: 2, 128>}]} {
    %c0 = arith.constant 0 : index
    %c0_0 = arith.constant 0 : index
    %0 = vector.load %arg1[%c0, %c0_0] : memref<16x32xf32, #tpu.memory_space<vmem>>, vector<16x32xf32>
    %c0_1 = arith.constant 0 : index
    %c0_2 = arith.constant 0 : index
    %1 = vector.load %arg3[%c0_1, %c0_2] : memref<1x32xf32, #tpu.memory_space<vmem>>, vector<1x32xf32>
    %c0_3 = arith.constant 0 : index
    %c0_4 = arith.constant 0 : index
    %2 = vector.load %arg4[%c0_3, %c0_4] : memref<1x32xf32, #tpu.memory_space<vmem>>, vector<1x32xf32>
    %cst = arith.constant dense<0.000000e+00> : vector<16xf32>
    %3 = vector.multi_reduction <add>, %0, %cst [1] : vector<16x32xf32> to vector<16xf32>
    %4 = vector.shape_cast %3 : vector<16xf32> to vector<16x1xf32>
    %cst_5 = arith.constant 3.200000e+01 : f32
    %5 = vector.broadcast %cst_5 : f32 to vector<16x1xf32>
    %6 = arith.divf %4, %5 : vector<16x1xf32>
    %7 = vector.broadcast %6 : vector<16x1xf32> to vector<16x32xf32>
    %8 = arith.subf %0, %7 : vector<16x32xf32>
    %9 = vector.broadcast %6 : vector<16x1xf32> to vector<16x32xf32>
    %10 = arith.subf %0, %9 : vector<16x32xf32>
    %11 = arith.mulf %8, %10 : vector<16x32xf32>
    %cst_6 = arith.constant dense<0.000000e+00> : vector<16xf32>
    %12 = vector.multi_reduction <add>, %11, %cst_6 [1] : vector<16x32xf32> to vector<16xf32>
    %13 = vector.shape_cast %12 : vector<16xf32> to vector<16x1xf32>
    %cst_7 = arith.constant 3.200000e+01 : f32
    %14 = vector.broadcast %cst_7 : f32 to vector<16x1xf32>
    %15 = arith.divf %13, %14 : vector<16x1xf32>
    %16 = vector.broadcast %6 : vector<16x1xf32> to vector<16x32xf32>
    %17 = arith.subf %0, %16 : vector<16x32xf32>
    %cst_8 = arith.constant 9.99999996E-13 : f32
    %18 = vector.broadcast %cst_8 : f32 to vector<16x1xf32>
    %19 = arith.addf %15, %18 : vector<16x1xf32>
    %20 = math.rsqrt %19 : vector<16x1xf32>
    %21 = vector.broadcast %20 : vector<16x1xf32> to vector<16x32xf32>
    %22 = arith.mulf %17, %21 : vector<16x32xf32>
    %23 = vector.broadcast %1 : vector<1x32xf32> to vector<16x32xf32>
    %24 = arith.mulf %22, %23 : vector<16x32xf32>
    %25 = vector.broadcast %2 : vector<1x32xf32> to vector<16x32xf32>
    %26 = arith.addf %24, %25 : vector<16x32xf32>
    %c0_9 = arith.constant 0 : index
    %c0_10 = arith.constant 0 : index
    %c0_11 = arith.constant 0 : index
    %27 = vector.load %arg2[%c0_9, %c0_10, %c0_11] : memref<4x8x8xf32, #tpu.memory_space<vmem>>, vector<4x8x8xf32>
    %28 = arith.truncf %26 : vector<16x32xf32> to vector<16x32xbf16>
    %c0_12 = arith.constant 0 : index
    %c0_13 = arith.constant 0 : index
    %c0_14 = arith.constant 0 : index
    %29 = vector.load %arg5[%c0_12, %c0_13, %c0_14] : memref<2x32x96xbf16, #tpu.memory_space<vmem>>, vector<1x32x96xbf16>
    %30 = vector.shape_cast %29 : vector<1x32x96xbf16> to vector<32x96xbf16>
    %cst_15 = arith.constant dense<0.000000e+00> : vector<16x96xf32>
    %31 = tpu.matmul %28, %30, %cst_15 {dimension_numbers = #tpu.dot_dimension_numbers<[1], [0], [0], [1], [0, 0, 1, 1], [], []>} : vector<16x32xbf16>, vector<32x96xbf16>, vector<16x96xf32> -> vector<16x96xf32>
    %c0_16 = arith.constant 0 : index
    %c0_17 = arith.constant 0 : index
    %c0_18 = arith.constant 0 : index
    %32 = vector.load %arg6[%c0_16, %c0_17, %c0_18] : memref<2x1x96xf32, #tpu.memory_space<vmem>>, vector<1x1x96xf32>
    %33 = vector.shape_cast %32 : vector<1x1x96xf32> to vector<1x96xf32>
    %34 = vector.broadcast %33 : vector<1x96xf32> to vector<16x96xf32>
    %35 = arith.addf %31, %34 : vector<16x96xf32>
    %36 = vector.extract_strided_slice %35 {offsets = [0, 0], sizes = [16, 32], strides = [1, 1]} : vector<16x96xf32> to vector<16x32xf32>
    %37 = vector.extract_strided_slice %36 {offsets = [0, 0], sizes = [16, 16], strides = [1, 1]} : vector<16x32xf32> to vector<16x16xf32>
    %38 = vector.shape_cast %37 : vector<16x16xf32> to vector<2x8x16xf32>
    %39 = vector.extract_strided_slice %36 {offsets = [0, 16], sizes = [16, 16], strides = [1, 1]} : vector<16x32xf32> to vector<16x16xf32>
    %40 = vector.shape_cast %39 : vector<16x16xf32> to vector<2x8x16xf32>
    %41 = tpu.concatenate %38, %40 in 0 : vector<2x8x16xf32>, vector<2x8x16xf32> -> vector<4x8x16xf32>
    %42 = vector.extract_strided_slice %35 {offsets = [0, 32], sizes = [16, 32], strides = [1, 1]} : vector<16x96xf32> to vector<16x32xf32>
    %43 = vector.extract_strided_slice %42 {offsets = [0, 0], sizes = [16, 16], strides = [1, 1]} : vector<16x32xf32> to vector<16x16xf32>
    %44 = vector.shape_cast %43 : vector<16x16xf32> to vector<2x8x16xf32>
    %45 = vector.extract_strided_slice %42 {offsets = [0, 16], sizes = [16, 16], strides = [1, 1]} : vector<16x32xf32> to vector<16x16xf32>
    %46 = vector.shape_cast %45 : vector<16x16xf32> to vector<2x8x16xf32>
    %47 = tpu.concatenate %44, %46 in 0 : vector<2x8x16xf32>, vector<2x8x16xf32> -> vector<4x8x16xf32>
    %48 = vector.extract_strided_slice %35 {offsets = [0, 64], sizes = [16, 32], strides = [1, 1]} : vector<16x96xf32> to vector<16x32xf32>
    %49 = vector.extract_strided_slice %48 {offsets = [0, 0], sizes = [16, 16], strides = [1, 1]} : vector<16x32xf32> to vector<16x16xf32>
    %50 = vector.shape_cast %49 : vector<16x16xf32> to vector<2x8x16xf32>
    %51 = vector.extract_strided_slice %48 {offsets = [0, 16], sizes = [16, 16], strides = [1, 1]} : vector<16x32xf32> to vector<16x16xf32>
    %52 = vector.shape_cast %51 : vector<16x16xf32> to vector<2x8x16xf32>
    %53 = tpu.concatenate %50, %52 in 0 : vector<2x8x16xf32>, vector<2x8x16xf32> -> vector<4x8x16xf32>
    %54 = arith.truncf %41 : vector<4x8x16xf32> to vector<4x8x16xbf16>
    %55 = arith.truncf %47 : vector<4x8x16xf32> to vector<4x8x16xbf16>
    "tpu.trace_start"() <{level = 10 : i32, message = "bqd,bkd->bqk"}> : () -> ()
    %cst_19 = arith.constant dense<0.000000e+00> : vector<4x8x8xf32>
    %56 = tpu.matmul %54, %55, %cst_19 {dimension_numbers = #tpu.dot_dimension_numbers<[2], [2], [1], [1], [0, 0, 0, 1, 1, 1], [0], [0]>} : vector<4x8x16xbf16>, vector<4x8x16xbf16>, vector<4x8x8xf32> -> vector<4x8x8xf32>
    "tpu.trace_stop"() : () -> ()
    %cst_20 = arith.constant 2.500000e-01 : f32
    %57 = vector.broadcast %cst_20 : f32 to vector<4x8x8xf32>
    %58 = arith.mulf %56, %57 : vector<4x8x8xf32>
    %59 = arith.addf %58, %27 : vector<4x8x8xf32>
    %cst_21 = arith.constant dense<0xFF800000> : vector<4x8xf32>
    %60 = vector.multi_reduction <maximumf>, %59, %cst_21 [2] : vector<4x8x8xf32> to vector<4x8xf32>
    %61 = vector.shape_cast %60 : vector<4x8xf32> to vector<4x8x1xf32>
    %62 = vector.broadcast %61 : vector<4x8x1xf32> to vector<4x8x8xf32>
    %63 = arith.subf %59, %62 : vector<4x8x8xf32>
    %64 = math.exp %63 : vector<4x8x8xf32>
    %cst_22 = arith.constant dense<0.000000e+00> : vector<4x8xf32>
    %65 = vector.multi_reduction <add>, %64, %cst_22 [2] : vector<4x8x8xf32> to vector<4x8xf32>
    %66 = vector.shape_cast %65 : vector<4x8xf32> to vector<4x8x1xf32>
    %67 = tpu.reciprocal %66 {approx = true} : vector<4x8x1xf32> -> vector<4x8x1xf32>
    %68 = vector.broadcast %67 : vector<4x8x1xf32> to vector<4x8x8xf32>
    %69 = arith.mulf %64, %68 : vector<4x8x8xf32>
    %70 = arith.truncf %69 : vector<4x8x8xf32> to vector<4x8x8xbf16>
    %71 = arith.truncf %53 : vector<4x8x16xf32> to vector<4x8x16xbf16>
    "tpu.trace_start"() <{level = 10 : i32, message = "bqk,bkd->bqd"}> : () -> ()
    %cst_23 = arith.constant dense<0.000000e+00> : vector<4x8x16xf32>
    %72 = tpu.matmul %70, %71, %cst_23 {dimension_numbers = #tpu.dot_dimension_numbers<[2], [1], [1], [2], [0, 0, 0, 1, 1, 2], [0], [0]>} : vector<4x8x8xbf16>, vector<4x8x16xbf16>, vector<4x8x16xf32> -> vector<4x8x16xf32>
    "tpu.trace_stop"() : () -> ()
    %73 = vector.extract_strided_slice %72 {offsets = [0, 0, 0], sizes = [2, 8, 16], strides = [1, 1, 1]} : vector<4x8x16xf32> to vector<2x8x16xf32>
    %74 = vector.extract_strided_slice %72 {offsets = [2, 0, 0], sizes = [2, 8, 16], strides = [1, 1, 1]} : vector<4x8x16xf32> to vector<2x8x16xf32>
    %75 = tpu.concatenate %73, %74 in 2 : vector<2x8x16xf32>, vector<2x8x16xf32> -> vector<2x8x32xf32>
    %76 = vector.shape_cast %75 : vector<2x8x32xf32> to vector<16x32xf32>
    %77 = arith.truncf %76 : vector<16x32xf32> to vector<16x32xbf16>
    %c0_24 = arith.constant 0 : index
    %c0_25 = arith.constant 0 : index
    %c0_26 = arith.constant 0 : index
    %78 = vector.load %arg7[%c0_24, %c0_25, %c0_26] : memref<2x32x32xbf16, #tpu.memory_space<vmem>>, vector<1x32x32xbf16>
    %79 = vector.shape_cast %78 : vector<1x32x32xbf16> to vector<32x32xbf16>
    %cst_27 = arith.constant dense<0.000000e+00> : vector<16x32xf32>
    %80 = tpu.matmul %77, %79, %cst_27 {dimension_numbers = #tpu.dot_dimension_numbers<[1], [0], [0], [1], [0, 0, 1, 1], [], []>} : vector<16x32xbf16>, vector<32x32xbf16>, vector<16x32xf32> -> vector<16x32xf32>
    %c0_28 = arith.constant 0 : index
    %c0_29 = arith.constant 0 : index
    %c0_30 = arith.constant 0 : index
    %81 = vector.load %arg8[%c0_28, %c0_29, %c0_30] : memref<2x1x32xf32, #tpu.memory_space<vmem>>, vector<1x1x32xf32>
    %82 = vector.shape_cast %81 : vector<1x1x32xf32> to vector<1x32xf32>
    %83 = vector.broadcast %82 : vector<1x32xf32> to vector<16x32xf32>
    %84 = arith.addf %80, %83 : vector<16x32xf32>
    %85 = arith.addf %26, %84 : vector<16x32xf32>
    %c0_31 = arith.constant 0 : index
    %c0_32 = arith.constant 0 : index
    %c0_33 = arith.constant 0 : index
    %86 = vector.load %arg9[%c0_31, %c0_32, %c0_33] : memref<2x1x32xf32, #tpu.memory_space<vmem>>, vector<1x1x32xf32>
    %87 = vector.shape_cast %86 : vector<1x1x32xf32> to vector<1x32xf32>
    %c0_34 = arith.constant 0 : index
    %c0_35 = arith.constant 0 : index
    %c0_36 = arith.constant 0 : index
    %88 = vector.load %arg10[%c0_34, %c0_35, %c0_36] : memref<2x1x32xf32, #tpu.memory_space<vmem>>, vector<1x1x32xf32>
    %89 = vector.shape_cast %88 : vector<1x1x32xf32> to vector<1x32xf32>
    %cst_37 = arith.constant dense<0.000000e+00> : vector<16xf32>
    %90 = vector.multi_reduction <add>, %85, %cst_37 [1] : vector<16x32xf32> to vector<16xf32>
    %91 = vector.shape_cast %90 : vector<16xf32> to vector<16x1xf32>
    %cst_38 = arith.constant 3.200000e+01 : f32
    %92 = vector.broadcast %cst_38 : f32 to vector<16x1xf32>
    %93 = arith.divf %91, %92 : vector<16x1xf32>
    %94 = vector.broadcast %93 : vector<16x1xf32> to vector<16x32xf32>
    %95 = arith.subf %85, %94 : vector<16x32xf32>
    %96 = vector.broadcast %93 : vector<16x1xf32> to vector<16x32xf32>
    %97 = arith.subf %85, %96 : vector<16x32xf32>
    %98 = arith.mulf %95, %97 : vector<16x32xf32>
    %cst_39 = arith.constant dense<0.000000e+00> : vector<16xf32>
    %99 = vector.multi_reduction <add>, %98, %cst_39 [1] : vector<16x32xf32> to vector<16xf32>
    %100 = vector.shape_cast %99 : vector<16xf32> to vector<16x1xf32>
    %cst_40 = arith.constant 3.200000e+01 : f32
    %101 = vector.broadcast %cst_40 : f32 to vector<16x1xf32>
    %102 = arith.divf %100, %101 : vector<16x1xf32>
    %103 = vector.broadcast %93 : vector<16x1xf32> to vector<16x32xf32>
    %104 = arith.subf %85, %103 : vector<16x32xf32>
    %cst_41 = arith.constant 9.99999996E-13 : f32
    %105 = vector.broadcast %cst_41 : f32 to vector<16x1xf32>
    %106 = arith.addf %102, %105 : vector<16x1xf32>
    %107 = math.rsqrt %106 : vector<16x1xf32>
    %108 = vector.broadcast %107 : vector<16x1xf32> to vector<16x32xf32>
    %109 = arith.mulf %104, %108 : vector<16x32xf32>
    %110 = vector.broadcast %87 : vector<1x32xf32> to vector<16x32xf32>
    %111 = arith.mulf %109, %110 : vector<16x32xf32>
    %112 = vector.broadcast %89 : vector<1x32xf32> to vector<16x32xf32>
    %113 = arith.addf %111, %112 : vector<16x32xf32>
    %114 = arith.truncf %113 : vector<16x32xf32> to vector<16x32xbf16>
    %c0_42 = arith.constant 0 : index
    %c0_43 = arith.constant 0 : index
    %c0_44 = arith.constant 0 : index
    %115 = vector.load %arg11[%c0_42, %c0_43, %c0_44] : memref<2x32x64xbf16, #tpu.memory_space<vmem>>, vector<1x32x64xbf16>
    %116 = vector.shape_cast %115 : vector<1x32x64xbf16> to vector<32x64xbf16>
    %cst_45 = arith.constant dense<0.000000e+00> : vector<16x64xf32>
    %117 = tpu.matmul %114, %116, %cst_45 {dimension_numbers = #tpu.dot_dimension_numbers<[1], [0], [0], [1], [0, 0, 1, 1], [], []>} : vector<16x32xbf16>, vector<32x64xbf16>, vector<16x64xf32> -> vector<16x64xf32>
    %c0_46 = arith.constant 0 : index
    %c0_47 = arith.constant 0 : index
    %c0_48 = arith.constant 0 : index
    %118 = vector.load %arg12[%c0_46, %c0_47, %c0_48] : memref<2x1x64xf32, #tpu.memory_space<vmem>>, vector<1x1x64xf32>
    %119 = vector.shape_cast %118 : vector<1x1x64xf32> to vector<1x64xf32>
    %120 = vector.broadcast %119 : vector<1x64xf32> to vector<16x64xf32>
    %121 = arith.addf %117, %120 : vector<16x64xf32>
    %cst_49 = arith.constant 5.000000e-01 : f32
    %122 = vector.broadcast %cst_49 : f32 to vector<16x64xf32>
    %123 = arith.mulf %122, %121 : vector<16x64xf32>
    %cst_50 = arith.constant 4.471500e-02 : f32
    %124 = vector.broadcast %cst_50 : f32 to vector<16x64xf32>
    %125 = arith.mulf %124, %121 : vector<16x64xf32>
    %126 = arith.mulf %125, %121 : vector<16x64xf32>
    %127 = arith.mulf %126, %121 : vector<16x64xf32>
    %128 = arith.addf %121, %127 : vector<16x64xf32>
    %cst_51 = arith.constant 0.797884583 : f32
    %129 = vector.broadcast %cst_51 : f32 to vector<16x64xf32>
    %130 = arith.mulf %129, %128 : vector<16x64xf32>
    %131 = math.tanh %130 : vector<16x64xf32>
    %cst_52 = arith.constant 1.000000e+00 : f32
    %132 = vector.broadcast %cst_52 : f32 to vector<16x64xf32>
    %133 = arith.addf %132, %131 : vector<16x64xf32>
    %134 = arith.mulf %123, %133 : vector<16x64xf32>
    %135 = arith.truncf %134 : vector<16x64xf32> to vector<16x64xbf16>
    %c0_53 = arith.constant 0 : index
    %c0_54 = arith.constant 0 : index
    %c0_55 = arith.constant 0 : index
    %136 = vector.load %arg13[%c0_53, %c0_54, %c0_55] : memref<2x64x32xbf16, #tpu.memory_space<vmem>>, vector<1x64x32xbf16>
    %137 = vector.shape_cast %136 : vector<1x64x32xbf16> to vector<64x32xbf16>
    %cst_56 = arith.constant dense<0.000000e+00> : vector<16x32xf32>
    %138 = tpu.matmul %135, %137, %cst_56 {dimension_numbers = #tpu.dot_dimension_numbers<[1], [0], [0], [1], [0, 0, 1, 1], [], []>} : vector<16x64xbf16>, vector<64x32xbf16>, vector<16x32xf32> -> vector<16x32xf32>
    %c0_57 = arith.constant 0 : index
    %c0_58 = arith.constant 0 : index
    %c0_59 = arith.constant 0 : index
    %139 = vector.load %arg14[%c0_57, %c0_58, %c0_59] : memref<2x1x32xf32, #tpu.memory_space<vmem>>, vector<1x1x32xf32>
    %140 = vector.shape_cast %139 : vector<1x1x32xf32> to vector<1x32xf32>
    %141 = vector.broadcast %140 : vector<1x32xf32> to vector<16x32xf32>
    %142 = arith.addf %138, %141 : vector<16x32xf32>
    %143 = arith.addf %113, %142 : vector<16x32xf32>
    %c0_60 = arith.constant 0 : index
    %c0_61 = arith.constant 0 : index
    %c0_62 = arith.constant 0 : index
    %144 = vector.load %arg15[%c0_60, %c0_61, %c0_62] : memref<2x1x32xf32, #tpu.memory_space<vmem>>, vector<1x1x32xf32>
    %145 = vector.shape_cast %144 : vector<1x1x32xf32> to vector<1x32xf32>
    %c0_63 = arith.constant 0 : index
    %c0_64 = arith.constant 0 : index
    %c0_65 = arith.constant 0 : index
    %146 = vector.load %arg16[%c0_63, %c0_64, %c0_65] : memref<2x1x32xf32, #tpu.memory_space<vmem>>, vector<1x1x32xf32>
    %147 = vector.shape_cast %146 : vector<1x1x32xf32> to vector<1x32xf32>
    %cst_66 = arith.constant dense<0.000000e+00> : vector<16xf32>
    %148 = vector.multi_reduction <add>, %143, %cst_66 [1] : vector<16x32xf32> to vector<16xf32>
    %149 = vector.shape_cast %148 : vector<16xf32> to vector<16x1xf32>
    %cst_67 = arith.constant 3.200000e+01 : f32
    %150 = vector.broadcast %cst_67 : f32 to vector<16x1xf32>
    %151 = arith.divf %149, %150 : vector<16x1xf32>
    %152 = vector.broadcast %151 : vector<16x1xf32> to vector<16x32xf32>
    %153 = arith.subf %143, %152 : vector<16x32xf32>
    %154 = vector.broadcast %151 : vector<16x1xf32> to vector<16x32xf32>
    %155 = arith.subf %143, %154 : vector<16x32xf32>
    %156 = arith.mulf %153, %155 : vector<16x32xf32>
    %cst_68 = arith.constant dense<0.000000e+00> : vector<16xf32>
    %157 = vector.multi_reduction <add>, %156, %cst_68 [1] : vector<16x32xf32> to vector<16xf32>
    %158 = vector.shape_cast %157 : vector<16xf32> to vector<16x1xf32>
    %cst_69 = arith.constant 3.200000e+01 : f32
    %159 = vector.broadcast %cst_69 : f32 to vector<16x1xf32>
    %160 = arith.divf %158, %159 : vector<16x1xf32>
    %161 = vector.broadcast %151 : vector<16x1xf32> to vector<16x32xf32>
    %162 = arith.subf %143, %161 : vector<16x32xf32>
    %cst_70 = arith.constant 9.99999996E-13 : f32
    %163 = vector.broadcast %cst_70 : f32 to vector<16x1xf32>
    %164 = arith.addf %160, %163 : vector<16x1xf32>
    %165 = math.rsqrt %164 : vector<16x1xf32>
    %166 = vector.broadcast %165 : vector<16x1xf32> to vector<16x32xf32>
    %167 = arith.mulf %162, %166 : vector<16x32xf32>
    %168 = vector.broadcast %145 : vector<1x32xf32> to vector<16x32xf32>
    %169 = arith.mulf %167, %168 : vector<16x32xf32>
    %170 = vector.broadcast %147 : vector<1x32xf32> to vector<16x32xf32>
    %171 = arith.addf %169, %170 : vector<16x32xf32>
    %172 = arith.truncf %171 : vector<16x32xf32> to vector<16x32xbf16>
    %c1 = arith.constant 1 : index
    %c0_71 = arith.constant 0 : index
    %c0_72 = arith.constant 0 : index
    %173 = vector.load %arg5[%c1, %c0_71, %c0_72] : memref<2x32x96xbf16, #tpu.memory_space<vmem>>, vector<1x32x96xbf16>
    %174 = vector.shape_cast %173 : vector<1x32x96xbf16> to vector<32x96xbf16>
    %cst_73 = arith.constant dense<0.000000e+00> : vector<16x96xf32>
    %175 = tpu.matmul %172, %174, %cst_73 {dimension_numbers = #tpu.dot_dimension_numbers<[1], [0], [0], [1], [0, 0, 1, 1], [], []>} : vector<16x32xbf16>, vector<32x96xbf16>, vector<16x96xf32> -> vector<16x96xf32>
    %c1_74 = arith.constant 1 : index
    %c0_75 = arith.constant 0 : index
    %c0_76 = arith.constant 0 : index
    %176 = vector.load %arg6[%c1_74, %c0_75, %c0_76] : memref<2x1x96xf32, #tpu.memory_space<vmem>>, vector<1x1x96xf32>
    %177 = vector.shape_cast %176 : vector<1x1x96xf32> to vector<1x96xf32>
    %178 = vector.broadcast %177 : vector<1x96xf32> to vector<16x96xf32>
    %179 = arith.addf %175, %178 : vector<16x96xf32>
    %180 = vector.extract_strided_slice %179 {offsets = [0, 0], sizes = [16, 32], strides = [1, 1]} : vector<16x96xf32> to vector<16x32xf32>
    %181 = vector.extract_strided_slice %180 {offsets = [0, 0], sizes = [16, 16], strides = [1, 1]} : vector<16x32xf32> to vector<16x16xf32>
    %182 = vector.shape_cast %181 : vector<16x16xf32> to vector<2x8x16xf32>
    %183 = vector.extract_strided_slice %180 {offsets = [0, 16], sizes = [16, 16], strides = [1, 1]} : vector<16x32xf32> to vector<16x16xf32>
    %184 = vector.shape_cast %183 : vector<16x16xf32> to vector<2x8x16xf32>
    %185 = tpu.concatenate %182, %184 in 0 : vector<2x8x16xf32>, vector<2x8x16xf32> -> vector<4x8x16xf32>
    %186 = vector.extract_strided_slice %179 {offsets = [0, 32], sizes = [16, 32], strides = [1, 1]} : vector<16x96xf32> to vector<16x32xf32>
    %187 = vector.extract_strided_slice %186 {offsets = [0, 0], sizes = [16, 16], strides = [1, 1]} : vector<16x32xf32> to vector<16x16xf32>
    %188 = vector.shape_cast %187 : vector<16x16xf32> to vector<2x8x16xf32>
    %189 = vector.extract_strided_slice %186 {offsets = [0, 16], sizes = [16, 16], strides = [1, 1]} : vector<16x32xf32> to vector<16x16xf32>
    %190 = vector.shape_cast %189 : vector<16x16xf32> to vector<2x8x16xf32>
    %191 = tpu.concatenate %188, %190 in 0 : vector<2x8x16xf32>, vector<2x8x16xf32> -> vector<4x8x16xf32>
    %192 = vector.extract_strided_slice %179 {offsets = [0, 64], sizes = [16, 32], strides = [1, 1]} : vector<16x96xf32> to vector<16x32xf32>
    %193 = vector.extract_strided_slice %192 {offsets = [0, 0], sizes = [16, 16], strides = [1, 1]} : vector<16x32xf32> to vector<16x16xf32>
    %194 = vector.shape_cast %193 : vector<16x16xf32> to vector<2x8x16xf32>
    %195 = vector.extract_strided_slice %192 {offsets = [0, 16], sizes = [16, 16], strides = [1, 1]} : vector<16x32xf32> to vector<16x16xf32>
    %196 = vector.shape_cast %195 : vector<16x16xf32> to vector<2x8x16xf32>
    %197 = tpu.concatenate %194, %196 in 0 : vector<2x8x16xf32>, vector<2x8x16xf32> -> vector<4x8x16xf32>
    %198 = arith.truncf %185 : vector<4x8x16xf32> to vector<4x8x16xbf16>
    %199 = arith.truncf %191 : vector<4x8x16xf32> to vector<4x8x16xbf16>
    "tpu.trace_start"() <{level = 10 : i32, message = "bqd,bkd->bqk"}> : () -> ()
    %cst_77 = arith.constant dense<0.000000e+00> : vector<4x8x8xf32>
    %200 = tpu.matmul %198, %199, %cst_77 {dimension_numbers = #tpu.dot_dimension_numbers<[2], [2], [1], [1], [0, 0, 0, 1, 1, 1], [0], [0]>} : vector<4x8x16xbf16>, vector<4x8x16xbf16>, vector<4x8x8xf32> -> vector<4x8x8xf32>
    "tpu.trace_stop"() : () -> ()
    %cst_78 = arith.constant 2.500000e-01 : f32
    %201 = vector.broadcast %cst_78 : f32 to vector<4x8x8xf32>
    %202 = arith.mulf %200, %201 : vector<4x8x8xf32>
    %203 = arith.addf %202, %27 : vector<4x8x8xf32>
    %cst_79 = arith.constant dense<0xFF800000> : vector<4x8xf32>
    %204 = vector.multi_reduction <maximumf>, %203, %cst_79 [2] : vector<4x8x8xf32> to vector<4x8xf32>
    %205 = vector.shape_cast %204 : vector<4x8xf32> to vector<4x8x1xf32>
    %206 = vector.broadcast %205 : vector<4x8x1xf32> to vector<4x8x8xf32>
    %207 = arith.subf %203, %206 : vector<4x8x8xf32>
    %208 = math.exp %207 : vector<4x8x8xf32>
    %cst_80 = arith.constant dense<0.000000e+00> : vector<4x8xf32>
    %209 = vector.multi_reduction <add>, %208, %cst_80 [2] : vector<4x8x8xf32> to vector<4x8xf32>
    %210 = vector.shape_cast %209 : vector<4x8xf32> to vector<4x8x1xf32>
    %211 = tpu.reciprocal %210 {approx = true} : vector<4x8x1xf32> -> vector<4x8x1xf32>
    %212 = vector.broadcast %211 : vector<4x8x1xf32> to vector<4x8x8xf32>
    %213 = arith.mulf %208, %212 : vector<4x8x8xf32>
    %214 = arith.truncf %213 : vector<4x8x8xf32> to vector<4x8x8xbf16>
    %215 = arith.truncf %197 : vector<4x8x16xf32> to vector<4x8x16xbf16>
    "tpu.trace_start"() <{level = 10 : i32, message = "bqk,bkd->bqd"}> : () -> ()
    %cst_81 = arith.constant dense<0.000000e+00> : vector<4x8x16xf32>
    %216 = tpu.matmul %214, %215, %cst_81 {dimension_numbers = #tpu.dot_dimension_numbers<[2], [1], [1], [2], [0, 0, 0, 1, 1, 2], [0], [0]>} : vector<4x8x8xbf16>, vector<4x8x16xbf16>, vector<4x8x16xf32> -> vector<4x8x16xf32>
    "tpu.trace_stop"() : () -> ()
    %217 = vector.extract_strided_slice %216 {offsets = [0, 0, 0], sizes = [2, 8, 16], strides = [1, 1, 1]} : vector<4x8x16xf32> to vector<2x8x16xf32>
    %218 = vector.extract_strided_slice %216 {offsets = [2, 0, 0], sizes = [2, 8, 16], strides = [1, 1, 1]} : vector<4x8x16xf32> to vector<2x8x16xf32>
    %219 = tpu.concatenate %217, %218 in 2 : vector<2x8x16xf32>, vector<2x8x16xf32> -> vector<2x8x32xf32>
    %220 = vector.shape_cast %219 : vector<2x8x32xf32> to vector<16x32xf32>
    %221 = arith.truncf %220 : vector<16x32xf32> to vector<16x32xbf16>
    %c1_82 = arith.constant 1 : index
    %c0_83 = arith.constant 0 : index
    %c0_84 = arith.constant 0 : index
    %222 = vector.load %arg7[%c1_82, %c0_83, %c0_84] : memref<2x32x32xbf16, #tpu.memory_space<vmem>>, vector<1x32x32xbf16>
    %223 = vector.shape_cast %222 : vector<1x32x32xbf16> to vector<32x32xbf16>
    %cst_85 = arith.constant dense<0.000000e+00> : vector<16x32xf32>
    %224 = tpu.matmul %221, %223, %cst_85 {dimension_numbers = #tpu.dot_dimension_numbers<[1], [0], [0], [1], [0, 0, 1, 1], [], []>} : vector<16x32xbf16>, vector<32x32xbf16>, vector<16x32xf32> -> vector<16x32xf32>
    %c1_86 = arith.constant 1 : index
    %c0_87 = arith.constant 0 : index
    %c0_88 = arith.constant 0 : index
    %225 = vector.load %arg8[%c1_86, %c0_87, %c0_88] : memref<2x1x32xf32, #tpu.memory_space<vmem>>, vector<1x1x32xf32>
    %226 = vector.shape_cast %225 : vector<1x1x32xf32> to vector<1x32xf32>
    %227 = vector.broadcast %226 : vector<1x32xf32> to vector<16x32xf32>
    %228 = arith.addf %224, %227 : vector<16x32xf32>
    %229 = arith.addf %171, %228 : vector<16x32xf32>
    %c1_89 = arith.constant 1 : index
    %c0_90 = arith.constant 0 : index
    %c0_91 = arith.constant 0 : index
    %230 = vector.load %arg9[%c1_89, %c0_90, %c0_91] : memref<2x1x32xf32, #tpu.memory_space<vmem>>, vector<1x1x32xf32>
    %231 = vector.shape_cast %230 : vector<1x1x32xf32> to vector<1x32xf32>
    %c1_92 = arith.constant 1 : index
    %c0_93 = arith.constant 0 : index
    %c0_94 = arith.constant 0 : index
    %232 = vector.load %arg10[%c1_92, %c0_93, %c0_94] : memref<2x1x32xf32, #tpu.memory_space<vmem>>, vector<1x1x32xf32>
    %233 = vector.shape_cast %232 : vector<1x1x32xf32> to vector<1x32xf32>
    %cst_95 = arith.constant dense<0.000000e+00> : vector<16xf32>
    %234 = vector.multi_reduction <add>, %229, %cst_95 [1] : vector<16x32xf32> to vector<16xf32>
    %235 = vector.shape_cast %234 : vector<16xf32> to vector<16x1xf32>
    %cst_96 = arith.constant 3.200000e+01 : f32
    %236 = vector.broadcast %cst_96 : f32 to vector<16x1xf32>
    %237 = arith.divf %235, %236 : vector<16x1xf32>
    %238 = vector.broadcast %237 : vector<16x1xf32> to vector<16x32xf32>
    %239 = arith.subf %229, %238 : vector<16x32xf32>
    %240 = vector.broadcast %237 : vector<16x1xf32> to vector<16x32xf32>
    %241 = arith.subf %229, %240 : vector<16x32xf32>
    %242 = arith.mulf %239, %241 : vector<16x32xf32>
    %cst_97 = arith.constant dense<0.000000e+00> : vector<16xf32>
    %243 = vector.multi_reduction <add>, %242, %cst_97 [1] : vector<16x32xf32> to vector<16xf32>
    %244 = vector.shape_cast %243 : vector<16xf32> to vector<16x1xf32>
    %cst_98 = arith.constant 3.200000e+01 : f32
    %245 = vector.broadcast %cst_98 : f32 to vector<16x1xf32>
    %246 = arith.divf %244, %245 : vector<16x1xf32>
    %247 = vector.broadcast %237 : vector<16x1xf32> to vector<16x32xf32>
    %248 = arith.subf %229, %247 : vector<16x32xf32>
    %cst_99 = arith.constant 9.99999996E-13 : f32
    %249 = vector.broadcast %cst_99 : f32 to vector<16x1xf32>
    %250 = arith.addf %246, %249 : vector<16x1xf32>
    %251 = math.rsqrt %250 : vector<16x1xf32>
    %252 = vector.broadcast %251 : vector<16x1xf32> to vector<16x32xf32>
    %253 = arith.mulf %248, %252 : vector<16x32xf32>
    %254 = vector.broadcast %231 : vector<1x32xf32> to vector<16x32xf32>
    %255 = arith.mulf %253, %254 : vector<16x32xf32>
    %256 = vector.broadcast %233 : vector<1x32xf32> to vector<16x32xf32>
    %257 = arith.addf %255, %256 : vector<16x32xf32>
    %258 = arith.truncf %257 : vector<16x32xf32> to vector<16x32xbf16>
    %c1_100 = arith.constant 1 : index
    %c0_101 = arith.constant 0 : index
    %c0_102 = arith.constant 0 : index
    %259 = vector.load %arg11[%c1_100, %c0_101, %c0_102] : memref<2x32x64xbf16, #tpu.memory_space<vmem>>, vector<1x32x64xbf16>
    %260 = vector.shape_cast %259 : vector<1x32x64xbf16> to vector<32x64xbf16>
    %cst_103 = arith.constant dense<0.000000e+00> : vector<16x64xf32>
    %261 = tpu.matmul %258, %260, %cst_103 {dimension_numbers = #tpu.dot_dimension_numbers<[1], [0], [0], [1], [0, 0, 1, 1], [], []>} : vector<16x32xbf16>, vector<32x64xbf16>, vector<16x64xf32> -> vector<16x64xf32>
    %c1_104 = arith.constant 1 : index
    %c0_105 = arith.constant 0 : index
    %c0_106 = arith.constant 0 : index
    %262 = vector.load %arg12[%c1_104, %c0_105, %c0_106] : memref<2x1x64xf32, #tpu.memory_space<vmem>>, vector<1x1x64xf32>
    %263 = vector.shape_cast %262 : vector<1x1x64xf32> to vector<1x64xf32>
    %264 = vector.broadcast %263 : vector<1x64xf32> to vector<16x64xf32>
    %265 = arith.addf %261, %264 : vector<16x64xf32>
    %cst_107 = arith.constant 5.000000e-01 : f32
    %266 = vector.broadcast %cst_107 : f32 to vector<16x64xf32>
    %267 = arith.mulf %266, %265 : vector<16x64xf32>
    %cst_108 = arith.constant 4.471500e-02 : f32
    %268 = vector.broadcast %cst_108 : f32 to vector<16x64xf32>
    %269 = arith.mulf %268, %265 : vector<16x64xf32>
    %270 = arith.mulf %269, %265 : vector<16x64xf32>
    %271 = arith.mulf %270, %265 : vector<16x64xf32>
    %272 = arith.addf %265, %271 : vector<16x64xf32>
    %cst_109 = arith.constant 0.797884583 : f32
    %273 = vector.broadcast %cst_109 : f32 to vector<16x64xf32>
    %274 = arith.mulf %273, %272 : vector<16x64xf32>
    %275 = math.tanh %274 : vector<16x64xf32>
    %cst_110 = arith.constant 1.000000e+00 : f32
    %276 = vector.broadcast %cst_110 : f32 to vector<16x64xf32>
    %277 = arith.addf %276, %275 : vector<16x64xf32>
    %278 = arith.mulf %267, %277 : vector<16x64xf32>
    %279 = arith.truncf %278 : vector<16x64xf32> to vector<16x64xbf16>
    %c1_111 = arith.constant 1 : index
    %c0_112 = arith.constant 0 : index
    %c0_113 = arith.constant 0 : index
    %280 = vector.load %arg13[%c1_111, %c0_112, %c0_113] : memref<2x64x32xbf16, #tpu.memory_space<vmem>>, vector<1x64x32xbf16>
    %281 = vector.shape_cast %280 : vector<1x64x32xbf16> to vector<64x32xbf16>
    %cst_114 = arith.constant dense<0.000000e+00> : vector<16x32xf32>
    %282 = tpu.matmul %279, %281, %cst_114 {dimension_numbers = #tpu.dot_dimension_numbers<[1], [0], [0], [1], [0, 0, 1, 1], [], []>} : vector<16x64xbf16>, vector<64x32xbf16>, vector<16x32xf32> -> vector<16x32xf32>
    %c1_115 = arith.constant 1 : index
    %c0_116 = arith.constant 0 : index
    %c0_117 = arith.constant 0 : index
    %283 = vector.load %arg14[%c1_115, %c0_116, %c0_117] : memref<2x1x32xf32, #tpu.memory_space<vmem>>, vector<1x1x32xf32>
    %284 = vector.shape_cast %283 : vector<1x1x32xf32> to vector<1x32xf32>
    %285 = vector.broadcast %284 : vector<1x32xf32> to vector<16x32xf32>
    %286 = arith.addf %282, %285 : vector<16x32xf32>
    %287 = arith.addf %257, %286 : vector<16x32xf32>
    %c1_118 = arith.constant 1 : index
    %c0_119 = arith.constant 0 : index
    %c0_120 = arith.constant 0 : index
    %288 = vector.load %arg15[%c1_118, %c0_119, %c0_120] : memref<2x1x32xf32, #tpu.memory_space<vmem>>, vector<1x1x32xf32>
    %289 = vector.shape_cast %288 : vector<1x1x32xf32> to vector<1x32xf32>
    %c1_121 = arith.constant 1 : index
    %c0_122 = arith.constant 0 : index
    %c0_123 = arith.constant 0 : index
    %290 = vector.load %arg16[%c1_121, %c0_122, %c0_123] : memref<2x1x32xf32, #tpu.memory_space<vmem>>, vector<1x1x32xf32>
    %291 = vector.shape_cast %290 : vector<1x1x32xf32> to vector<1x32xf32>
    %cst_124 = arith.constant dense<0.000000e+00> : vector<16xf32>
    %292 = vector.multi_reduction <add>, %287, %cst_124 [1] : vector<16x32xf32> to vector<16xf32>
    %293 = vector.shape_cast %292 : vector<16xf32> to vector<16x1xf32>
    %cst_125 = arith.constant 3.200000e+01 : f32
    %294 = vector.broadcast %cst_125 : f32 to vector<16x1xf32>
    %295 = arith.divf %293, %294 : vector<16x1xf32>
    %296 = vector.broadcast %295 : vector<16x1xf32> to vector<16x32xf32>
    %297 = arith.subf %287, %296 : vector<16x32xf32>
    %298 = vector.broadcast %295 : vector<16x1xf32> to vector<16x32xf32>
    %299 = arith.subf %287, %298 : vector<16x32xf32>
    %300 = arith.mulf %297, %299 : vector<16x32xf32>
    %cst_126 = arith.constant dense<0.000000e+00> : vector<16xf32>
    %301 = vector.multi_reduction <add>, %300, %cst_126 [1] : vector<16x32xf32> to vector<16xf32>
    %302 = vector.shape_cast %301 : vector<16xf32> to vector<16x1xf32>
    %cst_127 = arith.constant 3.200000e+01 : f32
    %303 = vector.broadcast %cst_127 : f32 to vector<16x1xf32>
    %304 = arith.divf %302, %303 : vector<16x1xf32>
    %305 = vector.broadcast %295 : vector<16x1xf32> to vector<16x32xf32>
    %306 = arith.subf %287, %305 : vector<16x32xf32>
    %cst_128 = arith.constant 9.99999996E-13 : f32
    %307 = vector.broadcast %cst_128 : f32 to vector<16x1xf32>
    %308 = arith.addf %304, %307 : vector<16x1xf32>
    %309 = math.rsqrt %308 : vector<16x1xf32>
    %310 = vector.broadcast %309 : vector<16x1xf32> to vector<16x32xf32>
    %311 = arith.mulf %306, %310 : vector<16x32xf32>
    %312 = vector.broadcast %289 : vector<1x32xf32> to vector<16x32xf32>
    %313 = arith.mulf %311, %312 : vector<16x32xf32>
    %314 = vector.broadcast %291 : vector<1x32xf32> to vector<16x32xf32>
    %315 = arith.addf %313, %314 : vector<16x32xf32>
    %316 = vector.shape_cast %315 : vector<16x32xf32> to vector<2x8x32xf32>
    %317 = vector.extract_strided_slice %316 {offsets = [0, 0, 0], sizes = [2, 1, 32], strides = [1, 1, 1]} : vector<2x8x32xf32> to vector<2x1x32xf32>
    %318 = vector.shape_cast %317 : vector<2x1x32xf32> to vector<2x32xf32>
    %319 = arith.truncf %318 : vector<2x32xf32> to vector<2x32xbf16>
    %c0_129 = arith.constant 0 : index
    %c0_130 = arith.constant 0 : index
    %320 = vector.load %arg17[%c0_129, %c0_130] : memref<32x32xbf16, #tpu.memory_space<vmem>>, vector<32x32xbf16>
    %cst_131 = arith.constant dense<0.000000e+00> : vector<2x32xf32>
    %321 = tpu.matmul %319, %320, %cst_131 {dimension_numbers = #tpu.dot_dimension_numbers<[1], [0], [0], [1], [0, 0, 1, 1], [], []>} : vector<2x32xbf16>, vector<32x32xbf16>, vector<2x32xf32> -> vector<2x32xf32>
    %c0_132 = arith.constant 0 : index
    %c0_133 = arith.constant 0 : index
    %322 = vector.load %arg18[%c0_132, %c0_133] : memref<1x32xf32, #tpu.memory_space<vmem>>, vector<1x32xf32>
    %323 = vector.broadcast %322 : vector<1x32xf32> to vector<2x32xf32>
    %324 = arith.addf %321, %323 : vector<2x32xf32>
    %325 = math.tanh %324 : vector<2x32xf32>
    %326 = arith.truncf %325 : vector<2x32xf32> to vector<2x32xbf16>
    %c0_134 = arith.constant 0 : index
    %c0_135 = arith.constant 0 : index
    %327 = vector.load %arg19[%c0_134, %c0_135] : memref<32x128xbf16, #tpu.memory_space<vmem>>, vector<32x128xbf16>
    %cst_136 = arith.constant dense<0.000000e+00> : vector<2x128xf32>
    %328 = tpu.matmul %326, %327, %cst_136 {dimension_numbers = #tpu.dot_dimension_numbers<[1], [0], [0], [1], [0, 0, 1, 1], [], []>} : vector<2x32xbf16>, vector<32x128xbf16>, vector<2x128xf32> -> vector<2x128xf32>
    %c0_137 = arith.constant 0 : index
    %c0_138 = arith.constant 0 : index
    %329 = vector.load %arg20[%c0_137, %c0_138] : memref<1x128xf32, #tpu.memory_space<vmem>>, vector<1x128xf32>
    %330 = vector.broadcast %329 : vector<1x128xf32> to vector<2x128xf32>
    %331 = arith.addf %328, %330 : vector<2x128xf32>
    %c0_139 = arith.constant 0 : index
    %c0_140 = arith.constant 0 : index
    %332 = vector.load %arg21[%c0_139, %c0_140] : memref<2x128xf32, #tpu.memory_space<vmem>>, vector<2x128xf32>
    tpu.vector_store %arg21[%c0_139, %c0_140], %331 {strides = array<i32>} : memref<2x128xf32, #tpu.memory_space<vmem>>, vector<2x128xf32>,
    return
  }
  func.func @transform_0(%arg0: i32) -> (i32, i32) {
    %c0_i32 = arith.constant 0 : i32
    %c0_i32_0 = arith.constant 0 : i32
    %c0_i32_1 = arith.constant 0 : i32
    return %c0_i32, %c0_i32_0 : i32, i32
  }
  func.func @transform_1(%arg0: i32) -> (i32, i32, i32) {
    %c0_i32 = arith.constant 0 : i32
    %c0_i32_0 = arith.constant 0 : i32
    %c0_i32_1 = arith.constant 0 : i32
    %c0_i32_2 = arith.constant 0 : i32
    return %c0_i32, %c0_i32_0, %c0_i32_1 : i32, i32, i32
  }
  func.func @transform_2(%arg0: i32) -> (i32, i32) {
    %c0_i32 = arith.constant 0 : i32
    %c0_i32_0 = arith.constant 0 : i32
    %c0_i32_1 = arith.constant 0 : i32
    return %c0_i32, %c0_i32_0 : i32, i32
  }
  func.func @transform_3(%arg0: i32) -> (i32, i32) {
    %c0_i32 = arith.constant 0 : i32
    %c0_i32_0 = arith.constant 0 : i32
    %c0_i32_1 = arith.constant 0 : i32
    return %c0_i32, %c0_i32_0 : i32, i32
  }
  func.func @transform_4(%arg0: i32) -> (i32, i32, i32) {
    %c0_i32 = arith.constant 0 : i32
    %c0_i32_0 = arith.constant 0 : i32
    %c0_i32_1 = arith.constant 0 : i32
    %c0_i32_2 = arith.constant 0 : i32
    return %c0_i32, %c0_i32_0, %c0_i32_1 : i32, i32, i32
  }
  func.func @transform_5(%arg0: i32) -> (i32, i32, i32) {
    %c0_i32 = arith.constant 0 : i32
    %c0_i32_0 = arith.constant 0 : i32
    %c0_i32_1 = arith.constant 0 : i32
    %c0_i32_2 = arith.constant 0 : i32
    return %c0_i32, %c0_i32_0, %c0_i32_1 : i32, i32, i32
  }
  func.func @transform_6(%arg0: i32) -> (i32, i32, i32) {
    %c0_i32 = arith.constant 0 : i32
    %c0_i32_0 = arith.constant 0 : i32
    %c0_i32_1 = arith.constant 0 : i32
    %c0_i32_2 = arith.constant 0 : i32
    return %c0_i32, %c0_i32_0, %c0_i32_1 : i32, i32, i32
  }
  func.func @transform_7(%arg0: i32) -> (i32, i32, i32) {
    %c0_i32 = arith.constant 0 : i32
    %c0_i32_0 = arith.constant 0 : i32
    %c0_i32_1 = arith.constant 0 : i32
    %c0_i32_2 = arith.constant 0 : i32
    return %c0_i32, %c0_i32_0, %c0_i32_1 : i32, i32, i32
  }
  func.func @transform_8(%arg0: i32) -> (i32, i32, i32) {
    %c0_i32 = arith.constant 0 : i32
    %c0_i32_0 = arith.constant 0 : i32
    %c0_i32_1 = arith.constant 0 : i32
    %c0_i32_2 = arith.constant 0 : i32
    return %c0_i32, %c0_i32_0, %c0_i32_1 : i32, i32, i32
  }
  func.func @transform_9(%arg0: i32) -> (i32, i32, i32) {
    %c0_i32 = arith.constant 0 : i32
    %c0_i32_0 = arith.constant 0 : i32
    %c0_i32_1 = arith.constant 0 : i32
    %c0_i32_2 = arith.constant 0 : i32
    return %c0_i32, %c0_i32_0, %c0_i32_1 : i32, i32, i32
  }
  func.func @transform_10(%arg0: i32) -> (i32, i32, i32) {
    %c0_i32 = arith.constant 0 : i32
    %c0_i32_0 = arith.constant 0 : i32
    %c0_i32_1 = arith.constant 0 : i32
    %c0_i32_2 = arith.constant 0 : i32
    return %c0_i32, %c0_i32_0, %c0_i32_1 : i32, i32, i32
  }
  func.func @transform_11(%arg0: i32) -> (i32, i32, i32) {
    %c0_i32 = arith.constant 0 : i32
    %c0_i32_0 = arith.constant 0 : i32
    %c0_i32_1 = arith.constant 0 : i32
    %c0_i32_2 = arith.constant 0 : i32
    return %c0_i32, %c0_i32_0, %c0_i32_1 : i32, i32, i32
  }
  func.func @transform_12(%arg0: i32) -> (i32, i32, i32) {
    %c0_i32 = arith.constant 0 : i32
    %c0_i32_0 = arith.constant 0 : i32
    %c0_i32_1 = arith.constant 0 : i32
    %c0_i32_2 = arith.constant 0 : i32
    return %c0_i32, %c0_i32_0, %c0_i32_1 : i32, i32, i32
  }
  func.func @transform_13(%arg0: i32) -> (i32, i32, i32) {
    %c0_i32 = arith.constant 0 : i32
    %c0_i32_0 = arith.constant 0 : i32
    %c0_i32_1 = arith.constant 0 : i32
    %c0_i32_2 = arith.constant 0 : i32
    return %c0_i32, %c0_i32_0, %c0_i32_1 : i32, i32, i32
  }
  func.func @transform_14(%arg0: i32) -> (i32, i32, i32) {
    %c0_i32 = arith.constant 0 : i32
    %c0_i32_0 = arith.constant 0 : i32
    %c0_i32_1 = arith.constant 0 : i32
    %c0_i32_2 = arith.constant 0 : i32
    return %c0_i32, %c0_i32_0, %c0_i32_1 : i32, i32, i32
  }
  func.func @transform_15(%arg0: i32) -> (i32, i32, i32) {
    %c0_i32 = arith.constant 0 : i32
    %c0_i32_0 = arith.constant 0 : i32
    %c0_i32_1 = arith.constant 0 : i32
    %c0_i32_2 = arith.constant 0 : i32
    return %c0_i32, %c0_i32_0, %c0_i32_1 : i32, i32, i32
  }
  func.func @transform_16(%arg0: i32) -> (i32, i32) {
    %c0_i32 = arith.constant 0 : i32
    %c0_i32_0 = arith.constant 0 : i32
    %c0_i32_1 = arith.constant 0 : i32
    return %c0_i32, %c0_i32_0 : i32, i32
  }
  func.func @transform_17(%arg0: i32) -> (i32, i32) {
    %c0_i32 = arith.constant 0 : i32
    %c0_i32_0 = arith.constant 0 : i32
    %c0_i32_1 = arith.constant 0 : i32
    return %c0_i32, %c0_i32_0 : i32, i32
  }
  func.func @transform_18(%arg0: i32) -> (i32, i32) {
    %c0_i32 = arith.constant 0 : i32
    %c0_i32_0 = arith.constant 0 : i32
    %c0_i32_1 = arith.constant 0 : i32
    return %c0_i32, %c0_i32_0 : i32, i32
  }
  func.func @transform_19(%arg0: i32) -> (i32, i32) {
    %c0_i32 = arith.constant 0 : i32
    %c0_i32_0 = arith.constant 0 : i32
    %c0_i32_1 = arith.constant 0 : i32
    return %c0_i32, %c0_i32_0 : i32, i32
  }
  func.func @transform_20(%arg0: i32) -> (i32, i32) {
    %c0_i32 = arith.constant 0 : i32
    %c0_i32_0 = arith.constant 0 : i32
    %c0_i32_1 = arith.constant 0 : i32
    return %c0_i32, %c0_i32_0 : i32, i32
  }
}

</mosaic_0001>

<llo_original>
// kernel: bert_classifier_forward.1
$region0: #{bert_classifier_forward.1}
  #allocation0 [shape = 'u32[]', space=smem, size = 0x4, offset = 0x4, fixed_abs, tag = 'smem constant byte address 0x4 - core index']
  #allocation1 [shape = 'u32[72,128]{1,0:T(1,128)}', space=vmem, size = 0x9000, scoped, tag = 'internal scratch']
  %s0 = inlined_call_operand.vmem [shape: f32[16,32], index: 0, kind: input, shape index: {}]
  %s1 = inlined_call_operand.vmem [shape: f32[4,8,8], index: 1, kind: input, shape index: {}]
  %s2 = inlined_call_operand.vmem [shape: f32[1,32], index: 2, kind: input, shape index: {}]
  %s3 = inlined_call_operand.vmem [shape: f32[1,32], index: 3, kind: input, shape index: {}]
  %s4 = inlined_call_operand.vmem [shape: bf16[2,32,96], index: 4, kind: input, shape index: {}]
  %s5 = inlined_call_operand.vmem [shape: f32[2,1,96], index: 5, kind: input, shape index: {}]
  %s6 = inlined_call_operand.vmem [shape: bf16[2,32,32], index: 6, kind: input, shape index: {}]
  %s7 = inlined_call_operand.vmem [shape: f32[2,1,32], index: 7, kind: input, shape index: {}]
  %s8 = inlined_call_operand.vmem [shape: f32[2,1,32], index: 8, kind: input, shape index: {}]
  %s9 = inlined_call_operand.vmem [shape: f32[2,1,32], index: 9, kind: input, shape index: {}]
  %s10 = inlined_call_operand.vmem [shape: bf16[2,32,64], index: 10, kind: input, shape index: {}]
  %s11 = inlined_call_operand.vmem [shape: f32[2,1,64], index: 11, kind: input, shape index: {}]
  %s12 = inlined_call_operand.vmem [shape: bf16[2,64,32], index: 12, kind: input, shape index: {}]
  %s13 = inlined_call_operand.vmem [shape: f32[2,1,32], index: 13, kind: input, shape index: {}]
  %s14 = inlined_call_operand.vmem [shape: f32[2,1,32], index: 14, kind: input, shape index: {}]
  %s15 = inlined_call_operand.vmem [shape: f32[2,1,32], index: 15, kind: input, shape index: {}]
  %s16 = inlined_call_operand.vmem [shape: bf16[32,32], index: 16, kind: input, shape index: {}]
  %s17 = inlined_call_operand.vmem [shape: f32[1,32], index: 17, kind: input, shape index: {}]
  %s18 = inlined_call_operand.vmem [shape: bf16[32,128], index: 18, kind: input, shape index: {}]
  %s19 = inlined_call_operand.vmem [shape: f32[1,128], index: 19, kind: input, shape index: {}]
  %s20 = inlined_call_operand.hbm [shape: f32[2,128], index: 20, kind: output, shape index: {}]
  %s21 = sld [smem:[#allocation0]]
  $region90: #{bert_classifier_forward.1} parent=0
    _
  %s23 = ssub.s32 1, %s21
  %s24 = scalar_select 0, %s23, %s21
  $region1: #{bert_classifier_forward.1} parent=0
    #allocation2 [shape = 'u8[1024]{0}', space=vmem, size = 0x400, scoped, tag = 'output window, operand 0, single buffered']
    #allocation3 [shape = 's32[1]{0}', space=sflag, size = 0x4, scoped, tag = 'scoped memory for bert_classifier_forward.1']
    %25 = vsyncpa [#allocation3], 0
    // Predicated region
    $region2: #{bert_classifier_forward.1} parent=1 // pred_check
      _
    $region3: #{bert_classifier_forward.1} parent=1 // pred_check_branch
      %27 = sbr.rel (0) target = $region5
    $region4: #{bert_classifier_forward.1} parent=1 // pred_region
      _
    $region5: #{bert_classifier_forward.1} parent=1 // pred_fallthru
      _
    // Predicated region
    $region6: #{bert_classifier_forward.1} parent=1 // pred_check
      _
    $region7: #{bert_classifier_forward.1} parent=1 // pred_check_branch
      %29 = sbr.rel (0) target = $region9
    $region8: #{bert_classifier_forward.1} parent=1 // pred_region
      _
    $region9: #{bert_classifier_forward.1} parent=1 // pred_fallthru
      _
    // Predicated region
    $region10: #{bert_classifier_forward.1} parent=1 // pred_check
      _
    $region11: #{bert_classifier_forward.1} parent=1 // pred_check_branch
      %31 = sbr.rel (0) target = $region13
    $region12: #{bert_classifier_forward.1} parent=1 // pred_region
      _
    $region13: #{bert_classifier_forward.1} parent=1 // pred_fallthru
      _
    // Predicated region
    $region14: #{bert_classifier_forward.1} parent=1 // pred_check
      _
    $region15: #{bert_classifier_forward.1} parent=1 // pred_check_branch
      %33 = sbr.rel (0) target = $region17
    $region16: #{bert_classifier_forward.1} parent=1 // pred_region
      _
    $region17: #{bert_classifier_forward.1} parent=1 // pred_fallthru
      _
    // Predicated region
    $region18: #{bert_classifier_forward.1} parent=1 // pred_check
      _
    $region19: #{bert_classifier_forward.1} parent=1 // pred_check_branch
      %35 = sbr.rel (0) target = $region21
    $region20: #{bert_classifier_forward.1} parent=1 // pred_region
      _
    $region21: #{bert_classifier_forward.1} parent=1 // pred_fallthru
      _
    // Predicated region
    $region22: #{bert_classifier_forward.1} parent=1 // pred_check
      _
    $region23: #{bert_classifier_forward.1} parent=1 // pred_check_branch
      %37 = sbr.rel (0) target = $region25
    $region24: #{bert_classifier_forward.1} parent=1 // pred_region
      _
    $region25: #{bert_classifier_forward.1} parent=1 // pred_fallthru
      _
    // Predicated region
    $region26: #{bert_classifier_forward.1} parent=1 // pred_check
      _
    $region27: #{bert_classifier_forward.1} parent=1 // pred_check_branch
      %39 = sbr.rel (0) target = $region29
    $region28: #{bert_classifier_forward.1} parent=1 // pred_region
      _
    $region29: #{bert_classifier_forward.1} parent=1 // pred_fallthru
      _
    // Predicated region
    $region30: #{bert_classifier_forward.1} parent=1 // pred_check
      _
    $region31: #{bert_classifier_forward.1} parent=1 // pred_check_branch
      %41 = sbr.rel (0) target = $region33
    $region32: #{bert_classifier_forward.1} parent=1 // pred_region
      _
    $region33: #{bert_classifier_forward.1} parent=1 // pred_fallthru
      _
    // Predicated region
    $region34: #{bert_classifier_forward.1} parent=1 // pred_check
      _
    $region35: #{bert_classifier_forward.1} parent=1 // pred_check_branch
      %43 = sbr.rel (0) target = $region37
    $region36: #{bert_classifier_forward.1} parent=1 // pred_region
      _
    $region37: #{bert_classifier_forward.1} parent=1 // pred_fallthru
      _
    // Predicated region
    $region38: #{bert_classifier_forward.1} parent=1 // pred_check
      _
    $region39: #{bert_classifier_forward.1} parent=1 // pred_check_branch
      %45 = sbr.rel (0) target = $region41
    $region40: #{bert_classifier_forward.1} parent=1 // pred_region
      _
    $region41: #{bert_classifier_forward.1} parent=1 // pred_fallthru
      _
    // Predicated region
    $region42: #{bert_classifier_forward.1} parent=1 // pred_check
      _
    $region43: #{bert_classifier_forward.1} parent=1 // pred_check_branch
      %47 = sbr.rel (0) target = $region45
    $region44: #{bert_classifier_forward.1} parent=1 // pred_region
      _
    $region45: #{bert_classifier_forward.1} parent=1 // pred_fallthru
      _
    // Predicated region
    $region46: #{bert_classifier_forward.1} parent=1 // pred_check
      _
    $region47: #{bert_classifier_forward.1} parent=1 // pred_check_branch
      %49 = sbr.rel (0) target = $region49
    $region48: #{bert_classifier_forward.1} parent=1 // pred_region
      _
    $region49: #{bert_classifier_forward.1} parent=1 // pred_fallthru
      _
    // Predicated region
    $region50: #{bert_classifier_forward.1} parent=1 // pred_check
      _
    $region51: #{bert_classifier_forward.1} parent=1 // pred_check_branch
      %51 = sbr.rel (0) target = $region53
    $region52: #{bert_classifier_forward.1} parent=1 // pred_region
      _
    $region53: #{bert_classifier_forward.1} parent=1 // pred_fallthru
      _
    // Predicated region
    $region54: #{bert_classifier_forward.1} parent=1 // pred_check
      _
    $region55: #{bert_classifier_forward.1} parent=1 // pred_check_branch
      %53 = sbr.rel (0) target = $region57
    $region56: #{bert_classifier_forward.1} parent=1 // pred_region
      _
    $region57: #{bert_classifier_forward.1} parent=1 // pred_fallthru
      _
    // Predicated region
    $region58: #{bert_classifier_forward.1} parent=1 // pred_check
      _
    $region59: #{bert_classifier_forward.1} parent=1 // pred_check_branch
      %55 = sbr.rel (0) target = $region61
    $region60: #{bert_classifier_forward.1} parent=1 // pred_region
      _
    $region61: #{bert_classifier_forward.1} parent=1 // pred_fallthru
      _
    // Predicated region
    $region62: #{bert_classifier_forward.1} parent=1 // pred_check
      _
    $region63: #{bert_classifier_forward.1} parent=1 // pred_check_branch
      %57 = sbr.rel (0) target = $region65
    $region64: #{bert_classifier_forward.1} parent=1 // pred_region
      _
    $region65: #{bert_classifier_forward.1} parent=1 // pred_fallthru
      _
    // Predicated region
    $region66: #{bert_classifier_forward.1} parent=1 // pred_check
      _
    $region67: #{bert_classifier_forward.1} parent=1 // pred_check_branch
      %59 = sbr.rel (0) target = $region69
    $region68: #{bert_classifier_forward.1} parent=1 // pred_region
      _
    $region69: #{bert_classifier_forward.1} parent=1 // pred_fallthru
      _
    // Predicated region
    $region70: #{bert_classifier_forward.1} parent=1 // pred_check
      _
    $region71: #{bert_classifier_forward.1} parent=1 // pred_check_branch
      %61 = sbr.rel (0) target = $region73
    $region72: #{bert_classifier_forward.1} parent=1 // pred_region
      _
    $region73: #{bert_classifier_forward.1} parent=1 // pred_fallthru
      _
    // Predicated region
    $region74: #{bert_classifier_forward.1} parent=1 // pred_check
      _
    $region75: #{bert_classifier_forward.1} parent=1 // pred_check_branch
      %63 = sbr.rel (0) target = $region77
    $region76: #{bert_classifier_forward.1} parent=1 // pred_region
      _
    $region77: #{bert_classifier_forward.1} parent=1 // pred_fallthru
      _
    // Predicated region
    $region78: #{bert_classifier_forward.1} parent=1 // pred_check
      _
    $region79: #{bert_classifier_forward.1} parent=1 // pred_check_branch
      %65 = sbr.rel (0) target = $region81
    $region80: #{bert_classifier_forward.1} parent=1 // pred_region
      _
    $region81: #{bert_classifier_forward.1} parent=1 // pred_fallthru
      _
    %v67 = vld [vmem:[%s0] sm:$0xff]
    %v68 = vld [vmem:[%s0 + $0x8] sm:$0xff]
    %v69 = vld [vmem:[%s2] sm:$0x1]
    %v70 = vld [vmem:[%s3] sm:$0x1]
    %vm71 = vcmask 261120
    %v72 = vsel %vm71, %v67, 0.0
    %73 = vadd.xlane.f32.xlu0 %v72
    %v74 = vpop.xlane.xlu0 %73
    %v75 = vsel %vm71, %v68, 0.0
    %76 = vadd.xlane.f32.xlu0 %v75
    %v77 = vpop.xlane.xlu0 %76
    %v78 = vrcp.pop 32.0
    %v79 = vmul.f32 32.0, %v78
    %v80 = vsub.f32 1.0, %v79
    %v81 = vmul.f32 %v78, %v80
    %v82 = vadd.f32 %v78, %v81
    %vm83 = vweird.f32 %v78
    %v84 = vsel %vm83, %v78, %v82
    %v85 = vmul.f32 %v74, %v84
    %v86 = vmul.f32 %v77, %v84
    %v87 = vsub.f32 %v67, %v85
    %v88 = vsub.f32 %v68, %v86
    %v89 = vmul.f32 %v87, %v87
    %v90 = vmul.f32 %v88, %v88
    %v91 = vsel %vm71, %v89, 0.0
    %92 = vadd.xlane.f32.xlu0 %v91
    %v93 = vpop.xlane.xlu0 %92
    %v94 = vsel %vm71, %v90, 0.0
    %95 = vadd.xlane.f32.xlu0 %v94
    %v96 = vpop.xlane.xlu0 %95
    %v97 = vmul.f32 %v93, %v84
    %v98 = vmul.f32 %v96, %v84
    %v99 = vadd.f32 %v97, 1e-12
    %v100 = vadd.f32 %v98, 1e-12
    %v101 = vrsqrt.pop %v99
    %v102 = vmul.f32 %v101, %v99
    %v103 = vmul.f32 %v102, %v101
    %v104 = vmul.f32 0.5, %v103
    %v105 = vsub.f32 1.5, %v104
    %v106 = vmul.f32 %v101, %v105
    %vm107 = vweird.f32 %v99
    %vm108 = vweird.f32 %v101
    %vm109 = vmor %vm107, %vm108
    %v110 = vsel %vm109, %v101, %v106
    %v111 = vrsqrt.pop %v100
    %v112 = vmul.f32 %v111, %v100
    %v113 = vmul.f32 %v112, %v111
    %v114 = vmul.f32 0.5, %v113
    %v115 = vsub.f32 1.5, %v114
    %v116 = vmul.f32 %v111, %v115
    %vm117 = vweird.f32 %v100
    %vm118 = vweird.f32 %v111
    %vm119 = vmor %vm117, %vm118
    %v120 = vsel %vm119, %v111, %v116
    %v121 = vmul.f32 %v87, %v110
    %v122 = vmul.f32 %v88, %v120
    %v124 = vperm.slane %v69, 0
    %v126 = vmul.f32 %v121, %v124
    %v127 = vmul.f32 %v122, %v124
    %v129 = vperm.slane %v70, 0
    %v131 = vadd.f32 %v126, %v129
    %v132 = vadd.f32 %v127, %v129
    %v133 = vld [vmem:[%s1] sm:$0xff]
    %v134 = vld [vmem:[%s1 + $0x8] sm:$0xff]
    %v135 = vld [vmem:[%s1 + $0x10] sm:$0xff]
    %v136 = vld [vmem:[%s1 + $0x18] sm:$0xff]
    %v137 = vpack.c.bf16 %v132, %v131
    %v138 = vld [vmem:[%s4] sm:$0xf]
    %v139 = vld [vmem:[%s4 + $0x4] sm:$0xf]
    %v140 = vld [vmem:[%s4 + $0x8] sm:$0xf]
    %v141 = vld [vmem:[%s4 + $0xc] sm:$0xf]
    %v142 = vld [vmem:[%s5] sm:$0x1]
    %v144 = vperm.slane %v142, 0
    %v150 = vunpack.c.l.b16 %v138
    %v151 = vunpack.c.l.b16 %v139
    %v152 = vunpack.c.l.b16 %v140
    %v153 = vunpack.c.l.b16 %v141
    %v154 = vpack.c.b16 %v151, %v150
    %v155 = vpack.c.b16 %v153, %v152
    %v159 = vsel %vm71, %v137, 0
    %161 = vmatpush.bf16.msra.mxu0 0
    %162 = vmatpush.bf16.msra.mxu0 0
    %163 = vmatpush.bf16.msra.mxu0 0
    %164 = vmatpush.bf16.msra.mxu0 0
    %165 = vmatpush.bf16.msra.mxu0 0
    %166 = vmatpush.bf16.msra.mxu0 0
    %167 = vmatpush.bf16.msra.mxu0 %v155
    %168 = vmatpush.bf16.msra.mxu0 %v154
    %169 = vmatmul.bf16.gmra.mxu0 %v159
    %v170 = vpop.f32.mrf.mxu0
    %v171 = vadd.f32 %v144, %v170
    %v172 = vpop.f32.mrf.mxu0
    %v173 = vadd.f32 %v144, %v172
    %174 = vdwg.mxu0
    %177 = vrot.lane.b32.xlu0 %v171, 112
    %v178 = vpop.permute.xlu0 %177
    %179 = vrot.lane.b32.xlu0 %v173, 112
    %v180 = vpop.permute.xlu0 %179
    %v183 = vpack.c.bf16 %v171, %v171
    %v184 = vpack.c.bf16 %v173, %v173
    %v185 = vpack.c.bf16 %v178, %v178
    %v186 = vpack.c.bf16 %v180, %v180
    %v188 = vunpack.c.l.b16 %v183
    %v189 = vpack.c.b16 %v188, %v188
    %190 = vrot.lane.b32.xlu0 %v189, 96
    %v191 = vpop.permute.xlu0 %190
    %vm192 = vcmask 130048
    %v194 = vsel %vm192, %v183, 0
    %v197 = vsel %vm192, %v191, 0
    %199 = vmatpush.bf16.xpose.msra.mxu0 0
    %200 = vmatpush.bf16.xpose.msra.mxu0 0
    %201 = vmatpush.bf16.xpose.msra.mxu0 0
    %202 = vmatpush.bf16.xpose.msra.mxu0 0
    %203 = vmatpush.bf16.xpose.msra.mxu0 0
    %204 = vmatpush.bf16.xpose.msra.mxu0 0
    %205 = vmatpush.bf16.xpose.msra.mxu0 0
    %206 = vmatpush.bf16.xpose.msra.mxu0 %v197
    %207 = vmatmul.bf16.gmra.mxu0 %v194
    %v208 = vpop.f32.mrf.mxu0
    %v209 = vadd.f32 0.0, %v208
    %v210 = vpop.f32.mrf.mxu0
    %211 = vdwg.mxu0
    %v213 = vunpack.c.l.b16 %v184
    %v214 = vpack.c.b16 %v213, %v213
    %215 = vrot.lane.b32.xlu0 %v214, 96
    %v216 = vpop.permute.xlu0 %215
    %v218 = vsel %vm192, %v184, 0
    %v221 = vsel %vm192, %v216, 0
    %223 = vmatpush.bf16.xpose.msra.mxu0 0
    %224 = vmatpush.bf16.xpose.msra.mxu0 0
    %225 = vmatpush.bf16.xpose.msra.mxu0 0
    %226 = vmatpush.bf16.xpose.msra.mxu0 0
    %227 = vmatpush.bf16.xpose.msra.mxu0 0
    %228 = vmatpush.bf16.xpose.msra.mxu0 0
    %229 = vmatpush.bf16.xpose.msra.mxu0 0
    %230 = vmatpush.bf16.xpose.msra.mxu0 %v221
    %231 = vmatmul.bf16.gmra.mxu0 %v218
    %v232 = vpop.f32.mrf.mxu0
    %v233 = vadd.f32 0.0, %v232
    %v234 = vpop.f32.mrf.mxu0
    %235 = vdwg.mxu0
    %v237 = vunpack.c.l.b16 %v185
    %v238 = vpack.c.b16 %v237, %v237
    %239 = vrot.lane.b32.xlu0 %v238, 96
    %v240 = vpop.permute.xlu0 %239
    %v242 = vsel %vm192, %v185, 0
    %v245 = vsel %vm192, %v240, 0
    %247 = vmatpush.bf16.xpose.msra.mxu0 0
    %248 = vmatpush.bf16.xpose.msra.mxu0 0
    %249 = vmatpush.bf16.xpose.msra.mxu0 0
    %250 = vmatpush.bf16.xpose.msra.mxu0 0
    %251 = vmatpush.bf16.xpose.msra.mxu0 0
    %252 = vmatpush.bf16.xpose.msra.mxu0 0
    %253 = vmatpush.bf16.xpose.msra.mxu0 0
    %254 = vmatpush.bf16.xpose.msra.mxu0 %v245
    %255 = vmatmul.bf16.gmra.mxu0 %v242
    %v256 = vpop.f32.mrf.mxu0
    %v257 = vadd.f32 0.0, %v256
    %v258 = vpop.f32.mrf.mxu0
    %259 = vdwg.mxu0
    %v261 = vunpack.c.l.b16 %v186
    %v262 = vpack.c.b16 %v261, %v261
    %263 = vrot.lane.b32.xlu0 %v262, 96
    %v264 = vpop.permute.xlu0 %263
    %v266 = vsel %vm192, %v186, 0
    %v269 = vsel %vm192, %v264, 0
    %271 = vmatpush.bf16.xpose.msra.mxu0 0
    %272 = vmatpush.bf16.xpose.msra.mxu0 0
    %273 = vmatpush.bf16.xpose.msra.mxu0 0
    %274 = vmatpush.bf16.xpose.msra.mxu0 0
    %275 = vmatpush.bf16.xpose.msra.mxu0 0
    %276 = vmatpush.bf16.xpose.msra.mxu0 0
    %277 = vmatpush.bf16.xpose.msra.mxu0 0
    %278 = vmatpush.bf16.xpose.msra.mxu0 %v269
    %279 = vmatmul.bf16.gmra.mxu0 %v266
    %v280 = vpop.f32.mrf.mxu0
    %v281 = vadd.f32 0.0, %v280
    %v282 = vpop.f32.mrf.mxu0
    %283 = vdwg.mxu0
    %v284 = vmul.f32 %v209, 0.25
    %v285 = vmul.f32 %v233, 0.25
    %v286 = vmul.f32 %v257, 0.25
    %v287 = vmul.f32 %v281, 0.25
    %v288 = vadd.f32 %v284, %v133
    %v289 = vadd.f32 %v285, %v134
    %v290 = vadd.f32 %v286, %v135
    %v291 = vadd.f32 %v287, %v136
    %vm292 = vcmask 64512
    %v293 = vsel %vm292, %v288, -inf
    %294 = vmax.xlane.f32.xlu0 %v293
    %v295 = vpop.xlane.xlu0 %294
    %v296 = vsel %vm292, %v289, -inf
    %297 = vmax.xlane.f32.xlu0 %v296
    %v298 = vpop.xlane.xlu0 %297
    %v299 = vsel %vm292, %v290, -inf
    %300 = vmax.xlane.f32.xlu0 %v299
    %v301 = vpop.xlane.xlu0 %300
    %v302 = vsel %vm292, %v291, -inf
    %303 = vmax.xlane.f32.xlu0 %v302
    %v304 = vpop.xlane.xlu0 %303
    %v305 = vsub.f32 %v288, %v295
    %v306 = vsub.f32 %v289, %v298
    %v307 = vsub.f32 %v290, %v301
    %v308 = vsub.f32 %v291, %v304
    %v309 = vmul.f32 %v305, 1.442695
    %v310 = vpow.pop %v309
    %v311 = vmul.f32 %v306, 1.442695
    %v312 = vpow.pop %v311
    %v313 = vmul.f32 %v307, 1.442695
    %v314 = vpow.pop %v313
    %v315 = vmul.f32 %v308, 1.442695
    %v316 = vpow.pop %v315
    %v317 = vsel %vm292, %v310, 0.0
    %318 = vadd.xlane.f32.xlu0 %v317
    %v319 = vpop.xlane.xlu0 %318
    %v320 = vsel %vm292, %v312, 0.0
    %321 = vadd.xlane.f32.xlu0 %v320
    %v322 = vpop.xlane.xlu0 %321
    %v323 = vsel %vm292, %v314, 0.0
    %324 = vadd.xlane.f32.xlu0 %v323
    %v325 = vpop.xlane.xlu0 %324
    %v326 = vsel %vm292, %v316, 0.0
    %327 = vadd.xlane.f32.xlu0 %v326
    %v328 = vpop.xlane.xlu0 %327
    %v329 = vrcp.pop %v319
    %v330 = vrcp.pop %v322
    %v331 = vrcp.pop %v325
    %v332 = vrcp.pop %v328
    %v333 = vmul.f32 %v310, %v329
    %v334 = vmul.f32 %v312, %v330
    %v335 = vmul.f32 %v314, %v331
    %v336 = vmul.f32 %v316, %v332
    %v337 = vpack.c.bf16 %v333, %v333
    %v338 = vpack.c.bf16 %v334, %v334
    %v339 = vpack.c.bf16 %v335, %v335
    %v340 = vpack.c.bf16 %v336, %v336
    %341 = vrot.lane.b32.xlu0 %v189, 64
    %v342 = vpop.permute.xlu0 %341
    %v344 = vsel %vm292, %v337, 0
    %vm346 = vcmask 1043456
    %v348 = vsel %vm346, %v342, 0
    %350 = vmatpush.bf16.msra.mxu0 0
    %351 = vmatpush.bf16.msra.mxu0 0
    %352 = vmatpush.bf16.msra.mxu0 0
    %353 = vmatpush.bf16.msra.mxu0 0
    %354 = vmatpush.bf16.msra.mxu0 0
    %355 = vmatpush.bf16.msra.mxu0 0
    %356 = vmatpush.bf16.msra.mxu0 0
    %357 = vmatpush.bf16.msra.mxu0 %v348
    %358 = vmatmul.bf16.gmra.mxu0 %v344
    %v359 = vpop.f32.mrf.mxu0
    %v360 = vadd.f32 0.0, %v359
    %v361 = vpop.f32.mrf.mxu0
    %362 = vdwg.mxu0
    %363 = vrot.lane.b32.xlu0 %v214, 64
    %v364 = vpop.permute.xlu0 %363
    %v366 = vsel %vm292, %v338, 0
    %v369 = vsel %vm346, %v364, 0
    %371 = vmatpush.bf16.msra.mxu0 0
    %372 = vmatpush.bf16.msra.mxu0 0
    %373 = vmatpush.bf16.msra.mxu0 0
    %374 = vmatpush.bf16.msra.mxu0 0
    %375 = vmatpush.bf16.msra.mxu0 0
    %376 = vmatpush.bf16.msra.mxu0 0
    %377 = vmatpush.bf16.msra.mxu0 0
    %378 = vmatpush.bf16.msra.mxu0 %v369
    %379 = vmatmul.bf16.gmra.mxu0 %v366
    %v380 = vpop.f32.mrf.mxu0
    %v381 = vadd.f32 0.0, %v380
    %v382 = vpop.f32.mrf.mxu0
    %383 = vdwg.mxu0
    %384 = vrot.lane.b32.xlu0 %v238, 64
    %v385 = vpop.permute.xlu0 %384
    %v387 = vsel %vm292, %v339, 0
    %v390 = vsel %vm346, %v385, 0
    %392 = vmatpush.bf16.msra.mxu0 0
    %393 = vmatpush.bf16.msra.mxu0 0
    %394 = vmatpush.bf16.msra.mxu0 0
    %395 = vmatpush.bf16.msra.mxu0 0
    %396 = vmatpush.bf16.msra.mxu0 0
    %397 = vmatpush.bf16.msra.mxu0 0
    %398 = vmatpush.bf16.msra.mxu0 0
    %399 = vmatpush.bf16.msra.mxu0 %v390
    %400 = vmatmul.bf16.gmra.mxu0 %v387
    %v401 = vpop.f32.mrf.mxu0
    %v402 = vadd.f32 0.0, %v401
    %v403 = vpop.f32.mrf.mxu0
    %404 = vdwg.mxu0
    %405 = vrot.lane.b32.xlu0 %v262, 64
    %v406 = vpop.permute.xlu0 %405
    %v408 = vsel %vm292, %v340, 0
    %v411 = vsel %vm346, %v406, 0
    %413 = vmatpush.bf16.msra.mxu0 0
    %414 = vmatpush.bf16.msra.mxu0 0
    %415 = vmatpush.bf16.msra.mxu0 0
    %416 = vmatpush.bf16.msra.mxu0 0
    %417 = vmatpush.bf16.msra.mxu0 0
    %418 = vmatpush.bf16.msra.mxu0 0
    %419 = vmatpush.bf16.msra.mxu0 0
    %420 = vmatpush.bf16.msra.mxu0 %v411
    %421 = vmatmul.bf16.gmra.mxu0 %v408
    %v422 = vpop.f32.mrf.mxu0
    %v423 = vadd.f32 0.0, %v422
    %v424 = vpop.f32.mrf.mxu0
    %425 = vdwg.mxu0
    %428 = vrot.lane.b32.xlu0 %v402, 16
    %v429 = vpop.permute.xlu0 %428
    %430 = vrot.lane.b32.xlu0 %v423, 16
    %v431 = vpop.permute.xlu0 %430
    %v434 = vsel %vm192, %v360, %v429
    %v435 = vsel %vm192, %v381, %v431
    %v436 = vpack.c.bf16 %v435, %v434
    %v437 = vld [vmem:[%s6] sm:$0xf]
    %v438 = vld [vmem:[%s6 + $0x4] sm:$0xf]
    %v439 = vld [vmem:[%s6 + $0x8] sm:$0xf]
    %v440 = vld [vmem:[%s6 + $0xc] sm:$0xf]
    %v441 = vld [vmem:[%s7] sm:$0x1]
    %v443 = vperm.slane %v441, 0
    %v449 = vunpack.c.l.b16 %v437
    %v450 = vunpack.c.l.b16 %v438
    %v451 = vunpack.c.l.b16 %v439
    %v452 = vunpack.c.l.b16 %v440
    %v453 = vpack.c.b16 %v450, %v449
    %v454 = vpack.c.b16 %v452, %v451
    %v458 = vsel %vm71, %v436, 0
    %460 = vmatpush.bf16.msra.mxu0 0
    %461 = vmatpush.bf16.msra.mxu0 0
    %462 = vmatpush.bf16.msra.mxu0 0
    %463 = vmatpush.bf16.msra.mxu0 0
    %464 = vmatpush.bf16.msra.mxu0 0
    %465 = vmatpush.bf16.msra.mxu0 0
    %466 = vmatpush.bf16.msra.mxu0 %v454
    %467 = vmatpush.bf16.msra.mxu0 %v453
    %468 = vmatmul.bf16.gmra.mxu0 %v458
    %v469 = vpop.f32.mrf.mxu0
    %v470 = vadd.f32 %v443, %v469
    %v471 = vpop.f32.mrf.mxu0
    %v472 = vadd.f32 %v443, %v471
    %473 = vdwg.mxu0
    %v474 = vadd.f32 %v131, %v470
    %v475 = vadd.f32 %v132, %v472
    %v476 = vld [vmem:[%s8] sm:$0x1]
    %v477 = vld [vmem:[%s9] sm:$0x1]
    %v478 = vsel %vm71, %v474, 0.0
    %479 = vadd.xlane.f32.xlu0 %v478
    %v480 = vpop.xlane.xlu0 %479
    %v481 = vsel %vm71, %v475, 0.0
    %482 = vadd.xlane.f32.xlu0 %v481
    %v483 = vpop.xlane.xlu0 %482
    %v484 = vmul.f32 %v480, %v84
    %v485 = vmul.f32 %v483, %v84
    %v486 = vsub.f32 %v474, %v484
    %v487 = vsub.f32 %v475, %v485
    %v488 = vmul.f32 %v486, %v486
    %v489 = vmul.f32 %v487, %v487
    %v490 = vsel %vm71, %v488, 0.0
    %491 = vadd.xlane.f32.xlu0 %v490
    %v492 = vpop.xlane.xlu0 %491
    %v493 = vsel %vm71, %v489, 0.0
    %494 = vadd.xlane.f32.xlu0 %v493
    %v495 = vpop.xlane.xlu0 %494
    %v496 = vmul.f32 %v492, %v84
    %v497 = vmul.f32 %v495, %v84
    %v498 = vadd.f32 %v496, 1e-12
    %v499 = vadd.f32 %v497, 1e-12
    %v500 = vrsqrt.pop %v498
    %v501 = vmul.f32 %v500, %v498
    %v502 = vmul.f32 %v501, %v500
    %v503 = vmul.f32 0.5, %v502
    %v504 = vsub.f32 1.5, %v503
    %v505 = vmul.f32 %v500, %v504
    %vm506 = vweird.f32 %v498
    %vm507 = vweird.f32 %v500
    %vm508 = vmor %vm506, %vm507
    %v509 = vsel %vm508, %v500, %v505
    %v510 = vrsqrt.pop %v499
    %v511 = vmul.f32 %v510, %v499
    %v512 = vmul.f32 %v511, %v510
    %v513 = vmul.f32 0.5, %v512
    %v514 = vsub.f32 1.5, %v513
    %v515 = vmul.f32 %v510, %v514
    %vm516 = vweird.f32 %v499
    %vm517 = vweird.f32 %v510
    %vm518 = vmor %vm516, %vm517
    %v519 = vsel %vm518, %v510, %v515
    %v520 = vmul.f32 %v486, %v509
    %v521 = vmul.f32 %v487, %v519
    %v523 = vperm.slane %v476, 0
    %v525 = vmul.f32 %v520, %v523
    %v526 = vmul.f32 %v521, %v523
    %v528 = vperm.slane %v477, 0
    %v530 = vadd.f32 %v525, %v528
    %v531 = vadd.f32 %v526, %v528
    %v532 = vpack.c.bf16 %v531, %v530
    %v533 = vld [vmem:[%s10] sm:$0xf]
    %v534 = vld [vmem:[%s10 + $0x4] sm:$0xf]
    %v535 = vld [vmem:[%s10 + $0x8] sm:$0xf]
    %v536 = vld [vmem:[%s10 + $0xc] sm:$0xf]
    %v537 = vld [vmem:[%s11] sm:$0x1]
    %v539 = vperm.slane %v537, 0
    %v545 = vunpack.c.l.b16 %v533
    %v546 = vunpack.c.l.b16 %v534
    %v547 = vunpack.c.l.b16 %v535
    %v548 = vunpack.c.l.b16 %v536
    %v549 = vpack.c.b16 %v546, %v545
    %v550 = vpack.c.b16 %v548, %v547
    %v554 = vsel %vm71, %v532, 0
    %556 = vmatpush.bf16.msra.mxu0 0
    %557 = vmatpush.bf16.msra.mxu0 0
    %558 = vmatpush.bf16.msra.mxu0 0
    %559 = vmatpush.bf16.msra.mxu0 0
    %560 = vmatpush.bf16.msra.mxu0 0
    %561 = vmatpush.bf16.msra.mxu0 0
    %562 = vmatpush.bf16.msra.mxu0 %v550
    %563 = vmatpush.bf16.msra.mxu0 %v549
    %564 = vmatmul.bf16.gmra.mxu0 %v554
    %v565 = vpop.f32.mrf.mxu0
    %v566 = vadd.f32 %v539, %v565
    %v567 = vpop.f32.mrf.mxu0
    %v568 = vadd.f32 %v539, %v567
    %569 = vdwg.mxu0
    %v570 = vmul.f32 %v566, 0.5
    %v571 = vmul.f32 %v568, 0.5
    %v572 = vmul.f32 %v566, 0.044715
    %v573 = vmul.f32 %v568, 0.044715
    %v574 = vmul.f32 %v572, %v566
    %v575 = vmul.f32 %v573, %v568
    %v576 = vmul.f32 %v574, %v566
    %v577 = vmul.f32 %v575, %v568
    %v578 = vadd.f32 %v566, %v576
    %v579 = vadd.f32 %v568, %v577
    %v580 = vmul.f32 %v578, 0.7978846
    %v581 = vmul.f32 %v579, 0.7978846
    %v582 = vtanh.pop %v580
    %v583 = vtanh.pop %v581
    %v584 = vadd.f32 %v582, 1.0
    %v585 = vadd.f32 %v583, 1.0
    %v586 = vmul.f32 %v570, %v584
    %v587 = vmul.f32 %v571, %v585
    %v588 = vpack.c.bf16 %v587, %v586
    %v589 = vld [vmem:[%s12] sm:$0xf]
    %v590 = vld [vmem:[%s12 + $0x4] sm:$0xf]
    %v591 = vld [vmem:[%s12 + $0x8] sm:$0xf]
    %v592 = vld [vmem:[%s12 + $0xc] sm:$0xf]
    %v593 = vld [vmem:[%s12 + $0x10] sm:$0xf]
    %v594 = vld [vmem:[%s12 + $0x14] sm:$0xf]
    %v595 = vld [vmem:[%s12 + $0x18] sm:$0xf]
    %v596 = vld [vmem:[%s12 + $0x1c] sm:$0xf]
    %v597 = vld [vmem:[%s13] sm:$0x1]
    %v599 = vperm.slane %v597, 0
    %v609 = vunpack.c.l.b16 %v589
    %v610 = vunpack.c.l.b16 %v590
    %v611 = vunpack.c.l.b16 %v591
    %v612 = vunpack.c.l.b16 %v592
    %v613 = vunpack.c.l.b16 %v593
    %v614 = vunpack.c.l.b16 %v594
    %v615 = vunpack.c.l.b16 %v595
    %v616 = vunpack.c.l.b16 %v596
    %v617 = vpack.c.b16 %v610, %v609
    %v618 = vpack.c.b16 %v612, %v611
    %v619 = vpack.c.b16 %v614, %v613
    %v620 = vpack.c.b16 %v616, %v615
    %vm625 = vcmask 523264
    %v627 = vsel %vm625, %v588, 0
    %629 = vmatpush.bf16.msra.mxu0 0
    %630 = vmatpush.bf16.msra.mxu0 0
    %631 = vmatpush.bf16.msra.mxu0 0
    %632 = vmatpush.bf16.msra.mxu0 0
    %633 = vmatpush.bf16.msra.mxu0 %v620
    %634 = vmatpush.bf16.msra.mxu0 %v619
    %635 = vmatpush.bf16.msra.mxu0 %v618
    %636 = vmatpush.bf16.msra.mxu0 %v617
    %637 = vmatmul.bf16.gmra.mxu0 %v627
    %v638 = vpop.f32.mrf.mxu0
    %v639 = vadd.f32 %v599, %v638
    %v640 = vpop.f32.mrf.mxu0
    %v641 = vadd.f32 %v599, %v640
    %642 = vdwg.mxu0
    %v643 = vadd.f32 %v530, %v639
    %v644 = vadd.f32 %v531, %v641
    %v645 = vld [vmem:[%s14] sm:$0x1]
    %v646 = vld [vmem:[%s15] sm:$0x1]
    %v647 = vsel %vm71, %v643, 0.0
    %648 = vadd.xlane.f32.xlu0 %v647
    %v649 = vpop.xlane.xlu0 %648
    %v650 = vsel %vm71, %v644, 0.0
    %651 = vadd.xlane.f32.xlu0 %v650
    %v652 = vpop.xlane.xlu0 %651
    %v653 = vmul.f32 %v649, %v84
    %v654 = vmul.f32 %v652, %v84
    %v655 = vsub.f32 %v643, %v653
    %v656 = vsub.f32 %v644, %v654
    %v657 = vmul.f32 %v655, %v655
    %v658 = vmul.f32 %v656, %v656
    %v659 = vsel %vm71, %v657, 0.0
    %660 = vadd.xlane.f32.xlu0 %v659
    %v661 = vpop.xlane.xlu0 %660
    %v662 = vsel %vm71, %v658, 0.0
    %663 = vadd.xlane.f32.xlu0 %v662
    %v664 = vpop.xlane.xlu0 %663
    %v665 = vmul.f32 %v661, %v84
    %v666 = vmul.f32 %v664, %v84
    %v667 = vadd.f32 %v665, 1e-12
    %v668 = vadd.f32 %v666, 1e-12
    %v669 = vrsqrt.pop %v667
    %v670 = vmul.f32 %v669, %v667
    %v671 = vmul.f32 %v670, %v669
    %v672 = vmul.f32 0.5, %v671
    %v673 = vsub.f32 1.5, %v672
    %v674 = vmul.f32 %v669, %v673
    %vm675 = vweird.f32 %v667
    %vm676 = vweird.f32 %v669
    %vm677 = vmor %vm675, %vm676
    %v678 = vsel %vm677, %v669, %v674
    %v679 = vrsqrt.pop %v668
    %v680 = vmul.f32 %v679, %v668
    %v681 = vmul.f32 %v680, %v679
    %v682 = vmul.f32 0.5, %v681
    %v683 = vsub.f32 1.5, %v682
    %v684 = vmul.f32 %v679, %v683
    %vm685 = vweird.f32 %v668
    %vm686 = vweird.f32 %v679
    %vm687 = vmor %vm685, %vm686
    %v688 = vsel %vm687, %v679, %v684
    %v689 = vmul.f32 %v655, %v678
    %v690 = vmul.f32 %v656, %v688
    %v692 = vperm.slane %v645, 0
    %v694 = vmul.f32 %v689, %v692
    %v695 = vmul.f32 %v690, %v692
    %v697 = vperm.slane %v646, 0
    %v699 = vadd.f32 %v694, %v697
    %v700 = vadd.f32 %v695, %v697
    %v701 = vpack.c.bf16 %v700, %v699
    %s702 = scalar_lea.vmem %s4, 16
    %v703 = vld [vmem:[%s702] sm:$0xf]
    %v704 = vld [vmem:[%s702 + $0x4] sm:$0xf]
    %v705 = vld [vmem:[%s702 + $0x8] sm:$0xf]
    %v706 = vld [vmem:[%s702 + $0xc] sm:$0xf]
    %s707 = scalar_lea.vmem %s5, 1
    %v708 = vld [vmem:[%s707] sm:$0x1]
    %v710 = vperm.slane %v708, 0
    %v716 = vunpack.c.l.b16 %v703
    %v717 = vunpack.c.l.b16 %v704
    %v718 = vunpack.c.l.b16 %v705
    %v719 = vunpack.c.l.b16 %v706
    %v720 = vpack.c.b16 %v717, %v716
    %v721 = vpack.c.b16 %v719, %v718
    %v725 = vsel %vm71, %v701, 0
    %727 = vmatpush.bf16.msra.mxu0 0
    %728 = vmatpush.bf16.msra.mxu0 0
    %729 = vmatpush.bf16.msra.mxu0 0
    %730 = vmatpush.bf16.msra.mxu0 0
    %731 = vmatpush.bf16.msra.mxu0 0
    %732 = vmatpush.bf16.msra.mxu0 0
    %733 = vmatpush.bf16.msra.mxu0 %v721
    %734 = vmatpush.bf16.msra.mxu0 %v720
    %735 = vmatmul.bf16.gmra.mxu0 %v725
    %v736 = vpop.f32.mrf.mxu0
    %v737 = vadd.f32 %v710, %v736
    %v738 = vpop.f32.mrf.mxu0
    %v739 = vadd.f32 %v710, %v738
    %740 = vdwg.mxu0
    %743 = vrot.lane.b32.xlu0 %v737, 112
    %v744 = vpop.permute.xlu0 %743
    %745 = vrot.lane.b32.xlu0 %v739, 112
    %v746 = vpop.permute.xlu0 %745
    %v749 = vpack.c.bf16 %v737, %v737
    %v750 = vpack.c.bf16 %v739, %v739
    %v751 = vpack.c.bf16 %v744, %v744
    %v752 = vpack.c.bf16 %v746, %v746
    %v754 = vunpack.c.l.b16 %v749
    %v755 = vpack.c.b16 %v754, %v754
    %756 = vrot.lane.b32.xlu0 %v755, 96
    %v757 = vpop.permute.xlu0 %756
    %v759 = vsel %vm192, %v749, 0
    %v762 = vsel %vm192, %v757, 0
    %764 = vmatpush.bf16.xpose.msra.mxu0 0
    %765 = vmatpush.bf16.xpose.msra.mxu0 0
    %766 = vmatpush.bf16.xpose.msra.mxu0 0
    %767 = vmatpush.bf16.xpose.msra.mxu0 0
    %768 = vmatpush.bf16.xpose.msra.mxu0 0
    %769 = vmatpush.bf16.xpose.msra.mxu0 0
    %770 = vmatpush.bf16.xpose.msra.mxu0 0
    %771 = vmatpush.bf16.xpose.msra.mxu0 %v762
    %772 = vmatmul.bf16.gmra.mxu0 %v759
    %v773 = vpop.f32.mrf.mxu0
    %v774 = vadd.f32 0.0, %v773
    %v775 = vpop.f32.mrf.mxu0
    %776 = vdwg.mxu0
    %v778 = vunpack.c.l.b16 %v750
    %v779 = vpack.c.b16 %v778, %v778
    %780 = vrot.lane.b32.xlu0 %v779, 96
    %v781 = vpop.permute.xlu0 %780
    %v783 = vsel %vm192, %v750, 0
    %v786 = vsel %vm192, %v781, 0
    %788 = vmatpush.bf16.xpose.msra.mxu0 0
    %789 = vmatpush.bf16.xpose.msra.mxu0 0
    %790 = vmatpush.bf16.xpose.msra.mxu0 0
    %791 = vmatpush.bf16.xpose.msra.mxu0 0
    %792 = vmatpush.bf16.xpose.msra.mxu0 0
    %793 = vmatpush.bf16.xpose.msra.mxu0 0
    %794 = vmatpush.bf16.xpose.msra.mxu0 0
    %795 = vmatpush.bf16.xpose.msra.mxu0 %v786
    %796 = vmatmul.bf16.gmra.mxu0 %v783
    %v797 = vpop.f32.mrf.mxu0
    %v798 = vadd.f32 0.0, %v797
    %v799 = vpop.f32.mrf.mxu0
    %800 = vdwg.mxu0
    %v802 = vunpack.c.l.b16 %v751
    %v803 = vpack.c.b16 %v802, %v802
    %804 = vrot.lane.b32.xlu0 %v803, 96
    %v805 = vpop.permute.xlu0 %804
    %v807 = vsel %vm192, %v751, 0
    %v810 = vsel %vm192, %v805, 0
    %812 = vmatpush.bf16.xpose.msra.mxu0 0
    %813 = vmatpush.bf16.xpose.msra.mxu0 0
    %814 = vmatpush.bf16.xpose.msra.mxu0 0
    %815 = vmatpush.bf16.xpose.msra.mxu0 0
    %816 = vmatpush.bf16.xpose.msra.mxu0 0
    %817 = vmatpush.bf16.xpose.msra.mxu0 0
    %818 = vmatpush.bf16.xpose.msra.mxu0 0
    %819 = vmatpush.bf16.xpose.msra.mxu0 %v810
    %820 = vmatmul.bf16.gmra.mxu0 %v807
    %v821 = vpop.f32.mrf.mxu0
    %v822 = vadd.f32 0.0, %v821
    %v823 = vpop.f32.mrf.mxu0
    %824 = vdwg.mxu0
    %v826 = vunpack.c.l.b16 %v752
    %v827 = vpack.c.b16 %v826, %v826
    %828 = vrot.lane.b32.xlu0 %v827, 96
    %v829 = vpop.permute.xlu0 %828
    %v831 = vsel %vm192, %v752, 0
    %v834 = vsel %vm192, %v829, 0
    %836 = vmatpush.bf16.xpose.msra.mxu0 0
    %837 = vmatpush.bf16.xpose.msra.mxu0 0
    %838 = vmatpush.bf16.xpose.msra.mxu0 0
    %839 = vmatpush.bf16.xpose.msra.mxu0 0
    %840 = vmatpush.bf16.xpose.msra.mxu0 0
    %841 = vmatpush.bf16.xpose.msra.mxu0 0
    %842 = vmatpush.bf16.xpose.msra.mxu0 0
    %843 = vmatpush.bf16.xpose.msra.mxu0 %v834
    %844 = vmatmul.bf16.gmra.mxu0 %v831
    %v845 = vpop.f32.mrf.mxu0
    %v846 = vadd.f32 0.0, %v845
    %v847 = vpop.f32.mrf.mxu0
    %848 = vdwg.mxu0
    %v849 = vmul.f32 %v774, 0.25
    %v850 = vmul.f32 %v798, 0.25
    %v851 = vmul.f32 %v822, 0.25
    %v852 = vmul.f32 %v846, 0.25
    %v853 = vadd.f32 %v849, %v133
    %v854 = vadd.f32 %v850, %v134
    %v855 = vadd.f32 %v851, %v135
    %v856 = vadd.f32 %v852, %v136
    %v857 = vsel %vm292, %v853, -inf
    %858 = vmax.xlane.f32.xlu0 %v857
    %v859 = vpop.xlane.xlu0 %858
    %v860 = vsel %vm292, %v854, -inf
    %861 = vmax.xlane.f32.xlu0 %v860
    %v862 = vpop.xlane.xlu0 %861
    %v863 = vsel %vm292, %v855, -inf
    %864 = vmax.xlane.f32.xlu0 %v863
    %v865 = vpop.xlane.xlu0 %864
    %v866 = vsel %vm292, %v856, -inf
    %867 = vmax.xlane.f32.xlu0 %v866
    %v868 = vpop.xlane.xlu0 %867
    %v869 = vsub.f32 %v853, %v859
    %v870 = vsub.f32 %v854, %v862
    %v871 = vsub.f32 %v855, %v865
    %v872 = vsub.f32 %v856, %v868
    %v873 = vmul.f32 %v869, 1.442695
    %v874 = vpow.pop %v873
    %v875 = vmul.f32 %v870, 1.442695
    %v876 = vpow.pop %v875
    %v877 = vmul.f32 %v871, 1.442695
    %v878 = vpow.pop %v877
    %v879 = vmul.f32 %v872, 1.442695
    %v880 = vpow.pop %v879
    %v881 = vsel %vm292, %v874, 0.0
    %882 = vadd.xlane.f32.xlu0 %v881
    %v883 = vpop.xlane.xlu0 %882
    %v884 = vsel %vm292, %v876, 0.0
    %885 = vadd.xlane.f32.xlu0 %v884
    %v886 = vpop.xlane.xlu0 %885
    %v887 = vsel %vm292, %v878, 0.0
    %888 = vadd.xlane.f32.xlu0 %v887
    %v889 = vpop.xlane.xlu0 %888
    %v890 = vsel %vm292, %v880, 0.0
    %891 = vadd.xlane.f32.xlu0 %v890
    %v892 = vpop.xlane.xlu0 %891
    %v893 = vrcp.pop %v883
    %v894 = vrcp.pop %v886
    %v895 = vrcp.pop %v889
    %v896 = vrcp.pop %v892
    %v897 = vmul.f32 %v874, %v893
    %v898 = vmul.f32 %v876, %v894
    %v899 = vmul.f32 %v878, %v895
    %v900 = vmul.f32 %v880, %v896
    %v901 = vpack.c.bf16 %v897, %v897
    %v902 = vpack.c.bf16 %v898, %v898
    %v903 = vpack.c.bf16 %v899, %v899
    %v904 = vpack.c.bf16 %v900, %v900
    %905 = vrot.lane.b32.xlu0 %v755, 64
    %v906 = vpop.permute.xlu0 %905
    %v908 = vsel %vm292, %v901, 0
    %v911 = vsel %vm346, %v906, 0
    %913 = vmatpush.bf16.msra.mxu0 0
    %914 = vmatpush.bf16.msra.mxu0 0
    %915 = vmatpush.bf16.msra.mxu0 0
    %916 = vmatpush.bf16.msra.mxu0 0
    %917 = vmatpush.bf16.msra.mxu0 0
    %918 = vmatpush.bf16.msra.mxu0 0
    %919 = vmatpush.bf16.msra.mxu0 0
    %920 = vmatpush.bf16.msra.mxu0 %v911
    %921 = vmatmul.bf16.gmra.mxu0 %v908
    %v922 = vpop.f32.mrf.mxu0
    %v923 = vadd.f32 0.0, %v922
    %v924 = vpop.f32.mrf.mxu0
    %925 = vdwg.mxu0
    %926 = vrot.lane.b32.xlu0 %v779, 64
    %v927 = vpop.permute.xlu0 %926
    %v929 = vsel %vm292, %v902, 0
    %v932 = vsel %vm346, %v927, 0
    %934 = vmatpush.bf16.msra.mxu0 0
    %935 = vmatpush.bf16.msra.mxu0 0
    %936 = vmatpush.bf16.msra.mxu0 0
    %937 = vmatpush.bf16.msra.mxu0 0
    %938 = vmatpush.bf16.msra.mxu0 0
    %939 = vmatpush.bf16.msra.mxu0 0
    %940 = vmatpush.bf16.msra.mxu0 0
    %941 = vmatpush.bf16.msra.mxu0 %v932
    %942 = vmatmul.bf16.gmra.mxu0 %v929
    %v943 = vpop.f32.mrf.mxu0
    %v944 = vadd.f32 0.0, %v943
    %v945 = vpop.f32.mrf.mxu0
    %946 = vdwg.mxu0
    %947 = vrot.lane.b32.xlu0 %v803, 64
    %v948 = vpop.permute.xlu0 %947
    %v950 = vsel %vm292, %v903, 0
    %v953 = vsel %vm346, %v948, 0
    %955 = vmatpush.bf16.msra.mxu0 0
    %956 = vmatpush.bf16.msra.mxu0 0
    %957 = vmatpush.bf16.msra.mxu0 0
    %958 = vmatpush.bf16.msra.mxu0 0
    %959 = vmatpush.bf16.msra.mxu0 0
    %960 = vmatpush.bf16.msra.mxu0 0
    %961 = vmatpush.bf16.msra.mxu0 0
    %962 = vmatpush.bf16.msra.mxu0 %v953
    %963 = vmatmul.bf16.gmra.mxu0 %v950
    %v964 = vpop.f32.mrf.mxu0
    %v965 = vadd.f32 0.0, %v964
    %v966 = vpop.f32.mrf.mxu0
    %967 = vdwg.mxu0
    %968 = vrot.lane.b32.xlu0 %v827, 64
    %v969 = vpop.permute.xlu0 %968
    %v971 = vsel %vm292, %v904, 0
    %v974 = vsel %vm346, %v969, 0
    %976 = vmatpush.bf16.msra.mxu0 0
    %977 = vmatpush.bf16.msra.mxu0 0
    %978 = vmatpush.bf16.msra.mxu0 0
    %979 = vmatpush.bf16.msra.mxu0 0
    %980 = vmatpush.bf16.msra.mxu0 0
    %981 = vmatpush.bf16.msra.mxu0 0
    %982 = vmatpush.bf16.msra.mxu0 0
    %983 = vmatpush.bf16.msra.mxu0 %v974
    %984 = vmatmul.bf16.gmra.mxu0 %v971
    %v985 = vpop.f32.mrf.mxu0
    %v986 = vadd.f32 0.0, %v985
    %v987 = vpop.f32.mrf.mxu0
    %988 = vdwg.mxu0
    %991 = vrot.lane.b32.xlu0 %v965, 16
    %v992 = vpop.permute.xlu0 %991
    %993 = vrot.lane.b32.xlu0 %v986, 16
    %v994 = vpop.permute.xlu0 %993
    %v997 = vsel %vm192, %v923, %v992
    %v998 = vsel %vm192, %v944, %v994
    %v999 = vpack.c.bf16 %v998, %v997
    %s1000 = scalar_lea.vmem %s6, 16
    %v1001 = vld [vmem:[%s1000] sm:$0xf]
    %v1002 = vld [vmem:[%s1000 + $0x4] sm:$0xf]
    %v1003 = vld [vmem:[%s1000 + $0x8] sm:$0xf]
    %v1004 = vld [vmem:[%s1000 + $0xc] sm:$0xf]
    %s1005 = scalar_lea.vmem %s7, 1
    %v1006 = vld [vmem:[%s1005] sm:$0x1]
    %v1008 = vperm.slane %v1006, 0
    %v1014 = vunpack.c.l.b16 %v1001
    %v1015 = vunpack.c.l.b16 %v1002
    %v1016 = vunpack.c.l.b16 %v1003
    %v1017 = vunpack.c.l.b16 %v1004
    %v1018 = vpack.c.b16 %v1015, %v1014
    %v1019 = vpack.c.b16 %v1017, %v1016
    %v1023 = vsel %vm71, %v999, 0
    %1025 = vmatpush.bf16.msra.mxu0 0
    %1026 = vmatpush.bf16.msra.mxu0 0
    %1027 = vmatpush.bf16.msra.mxu0 0
    %1028 = vmatpush.bf16.msra.mxu0 0
    %1029 = vmatpush.bf16.msra.mxu0 0
    %1030 = vmatpush.bf16.msra.mxu0 0
    %1031 = vmatpush.bf16.msra.mxu0 %v1019
    %1032 = vmatpush.bf16.msra.mxu0 %v1018
    %1033 = vmatmul.bf16.gmra.mxu0 %v1023
    %v1034 = vpop.f32.mrf.mxu0
    %v1035 = vadd.f32 %v1008, %v1034
    %v1036 = vpop.f32.mrf.mxu0
    %v1037 = vadd.f32 %v1008, %v1036
    %1038 = vdwg.mxu0
    %v1039 = vadd.f32 %v699, %v1035
    %v1040 = vadd.f32 %v700, %v1037
    %s1041 = scalar_lea.vmem %s8, 1
    %v1042 = vld [vmem:[%s1041] sm:$0x1]
    %s1043 = scalar_lea.vmem %s9, 1
    %v1044 = vld [vmem:[%s1043] sm:$0x1]
    %v1045 = vsel %vm71, %v1039, 0.0
    %1046 = vadd.xlane.f32.xlu0 %v1045
    %v1047 = vpop.xlane.xlu0 %1046
    %v1048 = vsel %vm71, %v1040, 0.0
    %1049 = vadd.xlane.f32.xlu0 %v1048
    %v1050 = vpop.xlane.xlu0 %1049
    %v1051 = vmul.f32 %v1047, %v84
    %v1052 = vmul.f32 %v1050, %v84
    %v1053 = vsub.f32 %v1039, %v1051
    %v1054 = vsub.f32 %v1040, %v1052
    %v1055 = vmul.f32 %v1053, %v1053
    %v1056 = vmul.f32 %v1054, %v1054
    %v1057 = vsel %vm71, %v1055, 0.0
    %1058 = vadd.xlane.f32.xlu0 %v1057
    %v1059 = vpop.xlane.xlu0 %1058
    %v1060 = vsel %vm71, %v1056, 0.0
    %1061 = vadd.xlane.f32.xlu0 %v1060
    %v1062 = vpop.xlane.xlu0 %1061
    %v1063 = vmul.f32 %v1059, %v84
    %v1064 = vmul.f32 %v1062, %v84
    %v1065 = vadd.f32 %v1063, 1e-12
    %v1066 = vadd.f32 %v1064, 1e-12
    %v1067 = vrsqrt.pop %v1065
    %v1068 = vmul.f32 %v1067, %v1065
    %v1069 = vmul.f32 %v1068, %v1067
    %v1070 = vmul.f32 0.5, %v1069
    %v1071 = vsub.f32 1.5, %v1070
    %v1072 = vmul.f32 %v1067, %v1071
    %vm1073 = vweird.f32 %v1065
    %vm1074 = vweird.f32 %v1067
    %vm1075 = vmor %vm1073, %vm1074
    %v1076 = vsel %vm1075, %v1067, %v1072
    %v1077 = vrsqrt.pop %v1066
    %v1078 = vmul.f32 %v1077, %v1066
    %v1079 = vmul.f32 %v1078, %v1077
    %v1080 = vmul.f32 0.5, %v1079
    %v1081 = vsub.f32 1.5, %v1080
    %v1082 = vmul.f32 %v1077, %v1081
    %vm1083 = vweird.f32 %v1066
    %vm1084 = vweird.f32 %v1077
    %vm1085 = vmor %vm1083, %vm1084
    %v1086 = vsel %vm1085, %v1077, %v1082
    %v1087 = vmul.f32 %v1053, %v1076
    %v1088 = vmul.f32 %v1054, %v1086
    %v1090 = vperm.slane %v1042, 0
    %v1092 = vmul.f32 %v1087, %v1090
    %v1093 = vmul.f32 %v1088, %v1090
    %v1095 = vperm.slane %v1044, 0
    %v1097 = vadd.f32 %v1092, %v1095
    %v1098 = vadd.f32 %v1093, %v1095
    %v1099 = vpack.c.bf16 %v1098, %v1097
    %s1100 = scalar_lea.vmem %s10, 16
    %v1101 = vld [vmem:[%s1100] sm:$0xf]
    %v1102 = vld [vmem:[%s1100 + $0x4] sm:$0xf]
    %v1103 = vld [vmem:[%s1100 + $0x8] sm:$0xf]
    %v1104 = vld [vmem:[%s1100 + $0xc] sm:$0xf]
    %s1105 = scalar_lea.vmem %s11, 1
    %v1106 = vld [vmem:[%s1105] sm:$0x1]
    %v1108 = vperm.slane %v1106, 0
    %v1114 = vunpack.c.l.b16 %v1101
    %v1115 = vunpack.c.l.b16 %v1102
    %v1116 = vunpack.c.l.b16 %v1103
    %v1117 = vunpack.c.l.b16 %v1104
    %v1118 = vpack.c.b16 %v1115, %v1114
    %v1119 = vpack.c.b16 %v1117, %v1116
    %v1123 = vsel %vm71, %v1099, 0
    %1125 = vmatpush.bf16.msra.mxu0 0
    %1126 = vmatpush.bf16.msra.mxu0 0
    %1127 = vmatpush.bf16.msra.mxu0 0
    %1128 = vmatpush.bf16.msra.mxu0 0
    %1129 = vmatpush.bf16.msra.mxu0 0
    %1130 = vmatpush.bf16.msra.mxu0 0
    %1131 = vmatpush.bf16.msra.mxu0 %v1119
    %1132 = vmatpush.bf16.msra.mxu0 %v1118
    %1133 = vmatmul.bf16.gmra.mxu0 %v1123
    %v1134 = vpop.f32.mrf.mxu0
    %v1135 = vadd.f32 %v1108, %v1134
    %v1136 = vpop.f32.mrf.mxu0
    %v1137 = vadd.f32 %v1108, %v1136
    %1138 = vdwg.mxu0
    %v1139 = vmul.f32 %v1135, 0.5
    %v1140 = vmul.f32 %v1137, 0.5
    %v1141 = vmul.f32 %v1135, 0.044715
    %v1142 = vmul.f32 %v1137, 0.044715
    %v1143 = vmul.f32 %v1141, %v1135
    %v1144 = vmul.f32 %v1142, %v1137
    %v1145 = vmul.f32 %v1143, %v1135
    %v1146 = vmul.f32 %v1144, %v1137
    %v1147 = vadd.f32 %v1135, %v1145
    %v1148 = vadd.f32 %v1137, %v1146
    %v1149 = vmul.f32 %v1147, 0.7978846
    %v1150 = vmul.f32 %v1148, 0.7978846
    %v1151 = vtanh.pop %v1149
    %v1152 = vtanh.pop %v1150
    %v1153 = vadd.f32 %v1151, 1.0
    %v1154 = vadd.f32 %v1152, 1.0
    %v1155 = vmul.f32 %v1139, %v1153
    %v1156 = vmul.f32 %v1140, %v1154
    %v1157 = vpack.c.bf16 %v1156, %v1155
    %s1158 = scalar_lea.vmem %s12, 32
    %v1159 = vld [vmem:[%s1158] sm:$0xf]
    %v1160 = vld [vmem:[%s1158 + $0x4] sm:$0xf]
    %v1161 = vld [vmem:[%s1158 + $0x8] sm:$0xf]
    %v1162 = vld [vmem:[%s1158 + $0xc] sm:$0xf]
    %v1163 = vld [vmem:[%s1158 + $0x10] sm:$0xf]
    %v1164 = vld [vmem:[%s1158 + $0x14] sm:$0xf]
    %v1165 = vld [vmem:[%s1158 + $0x18] sm:$0xf]
    %v1166 = vld [vmem:[%s1158 + $0x1c] sm:$0xf]
    %s1167 = scalar_lea.vmem %s13, 1
    %v1168 = vld [vmem:[%s1167] sm:$0x1]
    %v1170 = vperm.slane %v1168, 0
    %v1180 = vunpack.c.l.b16 %v1159
    %v1181 = vunpack.c.l.b16 %v1160
    %v1182 = vunpack.c.l.b16 %v1161
    %v1183 = vunpack.c.l.b16 %v1162
    %v1184 = vunpack.c.l.b16 %v1163
    %v1185 = vunpack.c.l.b16 %v1164
    %v1186 = vunpack.c.l.b16 %v1165
    %v1187 = vunpack.c.l.b16 %v1166
    %v1188 = vpack.c.b16 %v1181, %v1180
    %v1189 = vpack.c.b16 %v1183, %v1182
    %v1190 = vpack.c.b16 %v1185, %v1184
    %v1191 = vpack.c.b16 %v1187, %v1186
    %v1197 = vsel %vm625, %v1157, 0
    %1199 = vmatpush.bf16.msra.mxu0 0
    %1200 = vmatpush.bf16.msra.mxu0 0
    %1201 = vmatpush.bf16.msra.mxu0 0
    %1202 = vmatpush.bf16.msra.mxu0 0
    %1203 = vmatpush.bf16.msra.mxu0 %v1191
    %1204 = vmatpush.bf16.msra.mxu0 %v1190
    %1205 = vmatpush.bf16.msra.mxu0 %v1189
    %1206 = vmatpush.bf16.msra.mxu0 %v1188
    %1207 = vmatmul.bf16.gmra.mxu0 %v1197
    %v1208 = vpop.f32.mrf.mxu0
    %v1209 = vadd.f32 %v1170, %v1208
    %v1210 = vpop.f32.mrf.mxu0
    %v1211 = vadd.f32 %v1170, %v1210
    %1212 = vdwg.mxu0
    %v1213 = vadd.f32 %v1097, %v1209
    %v1214 = vadd.f32 %v1098, %v1211
    %s1215 = scalar_lea.vmem %s14, 1
    %v1216 = vld [vmem:[%s1215] sm:$0x1]
    %s1217 = scalar_lea.vmem %s15, 1
    %v1218 = vld [vmem:[%s1217] sm:$0x1]
    %v1219 = vsel %vm71, %v1213, 0.0
    %1220 = vadd.xlane.f32.xlu0 %v1219
    %v1221 = vpop.xlane.xlu0 %1220
    %v1222 = vsel %vm71, %v1214, 0.0
    %1223 = vadd.xlane.f32.xlu0 %v1222
    %v1224 = vpop.xlane.xlu0 %1223
    %v1225 = vmul.f32 %v1221, %v84
    %v1226 = vmul.f32 %v1224, %v84
    %v1227 = vsub.f32 %v1213, %v1225
    %v1228 = vsub.f32 %v1214, %v1226
    %v1229 = vmul.f32 %v1227, %v1227
    %v1230 = vmul.f32 %v1228, %v1228
    %v1231 = vsel %vm71, %v1229, 0.0
    %1232 = vadd.xlane.f32.xlu0 %v1231
    %v1233 = vpop.xlane.xlu0 %1232
    %v1234 = vsel %vm71, %v1230, 0.0
    %1235 = vadd.xlane.f32.xlu0 %v1234
    %v1236 = vpop.xlane.xlu0 %1235
    %v1237 = vmul.f32 %v1233, %v84
    %v1238 = vmul.f32 %v1236, %v84
    %v1239 = vadd.f32 %v1237, 1e-12
    %v1240 = vadd.f32 %v1238, 1e-12
    %v1241 = vrsqrt.pop %v1239
    %v1242 = vmul.f32 %v1241, %v1239
    %v1243 = vmul.f32 %v1242, %v1241
    %v1244 = vmul.f32 0.5, %v1243
    %v1245 = vsub.f32 1.5, %v1244
    %v1246 = vmul.f32 %v1241, %v1245
    %vm1247 = vweird.f32 %v1239
    %vm1248 = vweird.f32 %v1241
    %vm1249 = vmor %vm1247, %vm1248
    %v1250 = vsel %vm1249, %v1241, %v1246
    %v1251 = vrsqrt.pop %v1240
    %v1252 = vmul.f32 %v1251, %v1240
    %v1253 = vmul.f32 %v1252, %v1251
    %v1254 = vmul.f32 0.5, %v1253
    %v1255 = vsub.f32 1.5, %v1254
    %v1256 = vmul.f32 %v1251, %v1255
    %vm1257 = vweird.f32 %v1240
    %vm1258 = vweird.f32 %v1251
    %vm1259 = vmor %vm1257, %vm1258
    %v1260 = vsel %vm1259, %v1251, %v1256
    %v1261 = vmul.f32 %v1227, %v1250
    %v1262 = vmul.f32 %v1228, %v1260
    %v1264 = vperm.slane %v1216, 0
    %v1266 = vmul.f32 %v1261, %v1264
    %v1267 = vmul.f32 %v1262, %v1264
    %v1269 = vperm.slane %v1218, 0
    %v1271 = vadd.f32 %v1266, %v1269
    %v1272 = vadd.f32 %v1267, %v1269
    %v1273 = vpack.c.bf16 %v1271, %v1271
    %v1274 = vpack.c.bf16 %v1272, %v1272
    %v1275 = vld [vmem:[%s16] sm:$0xf]
    %v1276 = vld [vmem:[%s16 + $0x4] sm:$0xf]
    %v1277 = vld [vmem:[%s16 + $0x8] sm:$0xf]
    %v1278 = vld [vmem:[%s16 + $0xc] sm:$0xf]
    %v1279 = vld [vmem:[%s17] sm:$0x1]
    %v1281 = vperm.slane %v1279, 0
    %v1285 = vunpack.c.l.b16 %v1273
    %v1286 = vunpack.c.l.b16 %v1274
    %v1287 = vrot.slane %v1286, 7
    %vm1288 = vcmask 1041409
    %v1289 = vsel %vm1288, %v1287, %v1285
    %v1290 = vpack.c.b16 %v1289, %v1289
    %v1295 = vunpack.c.l.b16 %v1275
    %v1296 = vunpack.c.l.b16 %v1276
    %v1297 = vunpack.c.l.b16 %v1277
    %v1298 = vunpack.c.l.b16 %v1278
    %v1299 = vpack.c.b16 %v1296, %v1295
    %v1300 = vpack.c.b16 %v1298, %v1297
    %v1304 = vsel %vm71, %v1290, 0
    %1306 = vmatpush.bf16.msra.mxu0 0
    %1307 = vmatpush.bf16.msra.mxu0 0
    %1308 = vmatpush.bf16.msra.mxu0 0
    %1309 = vmatpush.bf16.msra.mxu0 0
    %1310 = vmatpush.bf16.msra.mxu0 0
    %1311 = vmatpush.bf16.msra.mxu0 0
    %1312 = vmatpush.bf16.msra.mxu0 %v1300
    %1313 = vmatpush.bf16.msra.mxu0 %v1299
    %1314 = vmatmul.bf16.gmra.mxu0 %v1304
    %v1315 = vpop.f32.mrf.mxu0
    %v1316 = vadd.f32 %v1281, %v1315
    %v1317 = vpop.f32.mrf.mxu0
    %1318 = vdwg.mxu0
    %v1319 = vtanh.pop %v1316
    %v1320 = vpack.c.bf16 %v1319, %v1319
    %v1321 = vld [vmem:[%s18] sm:$0xf]
    %v1322 = vld [vmem:[%s18 + $0x4] sm:$0xf]
    %v1323 = vld [vmem:[%s18 + $0x8] sm:$0xf]
    %v1324 = vld [vmem:[%s18 + $0xc] sm:$0xf]
    %v1325 = vld [vmem:[%s19] sm:$0x1]
    %v1327 = vperm.slane %v1325, 0
    %v1333 = vunpack.c.l.b16 %v1321
    %v1334 = vunpack.c.l.b16 %v1322
    %v1335 = vunpack.c.l.b16 %v1323
    %v1336 = vunpack.c.l.b16 %v1324
    %v1337 = vpack.c.b16 %v1334, %v1333
    %v1338 = vpack.c.b16 %v1336, %v1335
    %v1342 = vsel %vm71, %v1320, 0
    %1344 = vmatpush.bf16.msra.mxu0 0
    %1345 = vmatpush.bf16.msra.mxu0 0
    %1346 = vmatpush.bf16.msra.mxu0 0
    %1347 = vmatpush.bf16.msra.mxu0 0
    %1348 = vmatpush.bf16.msra.mxu0 0
    %1349 = vmatpush.bf16.msra.mxu0 0
    %1350 = vmatpush.bf16.msra.mxu0 %v1338
    %1351 = vmatpush.bf16.msra.mxu0 %v1337
    %1352 = vmatmul.bf16.gmra.mxu0 %v1342
    %v1353 = vpop.f32.mrf.mxu0
    %v1354 = vadd.f32 %v1327, %v1353
    %v1355 = vpop.f32.mrf.mxu0
    %1356 = vdwg.mxu0
    %1357 = vst [vmem:[#allocation2] sm:$0x3] %v1354
    // Predicated region
    $region82: #{bert_classifier_forward.1} parent=1 // pred_check
      _
    $region83: #{bert_classifier_forward.1} parent=1 // pred_check_branch
      %1359 = sbr.rel (0) target = $region85
    $region84: #{bert_classifier_forward.1} parent=1 // pred_region
      %1361 = vsyncadd [#allocation3], 0
      %s1363 = sshll.u32 [#allocation2], 4
      %s1364 = int_to_ptr.vmem [resolvable:$true] %s1363
      %s1365 = sshll.u32 %s20, 4
      %s1366 = int_to_ptr.hbm [resolvable:$true] %s1365
      %1368 = dma.vmem_to_hbm [thread:$0]  %s1364, 32, %s1366, [#allocation3]
    $region85: #{bert_classifier_forward.1} parent=1 // pred_fallthru
      _
    // Predicated region
    $region86: #{bert_classifier_forward.1} parent=1 // pred_check
      _
    $region87: #{bert_classifier_forward.1} parent=1 // pred_check_branch
      %1370 = sbr.rel (0) target = $region89
    $region88: #{bert_classifier_forward.1} parent=1 // pred_region
      %1372 = dma.done [#allocation3], 32
    $region89: #{bert_classifier_forward.1} parent=1 // pred_fallthru
      _
    %1373 = vsyncpa [#allocation3], 1

</llo_original>
